<compile_context>
chip_gen: v7x
topology: tpu7x:2x2x1
jax: 0.10.0
libtpu: 0.0.40
codegen_flags: <defaults>
</compile_context>

<pallas_src>
import functools

import numpy as np
import jax
import jax.numpy as jnp
from jax.experimental import pallas as pl
from jax.experimental.pallas import tpu as pltpu


def _round_up(x, m):
    return (x + m - 1) // m * m


def _bert_embedding_kernel(w_ref, hid_ref, a_ref, inv_ref, proj_ref, out_ref,
                           mix_ref, *pooled_scratch, mix_dtype, single_s):
    # w_ref     : SMEM (L,)            f32  softmax(mix_weights)*gamma (scalar prefetch)
    # hid_ref   : VMEM (Bb, 1, tS, H)  bf16 hidden-state tile of layer l
    # a_ref     : VMEM (Bb, T, tS)     bf16 0/1 subword->word indicator
    # inv_ref   : VMEM (Bb, T, 1)      f32  1/len (0 for padded word slots)
    # proj_ref  : VMEM (H, Np)         bf16 projection weight (transposed, lane-padded)
    # out_ref   : VMEM (Bb, T, Np)     f32
    # mix_ref   : VMEM (Bb, tS, H)     ScalarMix accumulator (bf16 on v6e/v7x, f32 on v5e)
    # pooled_scratch (optional): VMEM (Bb, T, H) f32 accumulator across S tiles
    s = pl.program_id(1)
    l = pl.program_id(2)
    n_s = pl.num_programs(1)
    n_l = pl.num_programs(2)

    # --- ScalarMix: accumulate w[l] * hidden_l across the L grid axis (VPU) ---
    contrib = w_ref[l].astype(mix_dtype) * hid_ref[:, 0, :, :].astype(mix_dtype)

    @pl.when(l == 0)
    def _():
        mix_ref[...] = contrib          # first layer: plain store (no zero-init RMW)

    @pl.when(l > 0)
    def _():
        mix_ref[...] += contrib

    # --- on the last layer step: subword->word sum-pooling (MXU), then finish ---
    @pl.when(l == n_l - 1)
    def _():
        pool = jnp.einsum("bts,bsh->bth", a_ref[...],
                          mix_ref[...].astype(jnp.bfloat16),
                          preferred_element_type=jnp.float32)        # (Bb, T, H) f32

        def finalize(pooled):
            # mean = sum * (1/len) in exact f32, then ONE 2D bias-free projection
            scaled = (pooled * inv_ref[...]).astype(jnp.bfloat16)    # (Bb, T, H)
            bb, t, h = scaled.shape
            flat = jnp.dot(scaled.reshape(bb * t, h), proj_ref[...],
                           preferred_element_type=jnp.float32)       # (Bb*T, Np)
            out_ref[...] = flat.reshape(bb, t, proj_ref.shape[1]).astype(out_ref.dtype)

        if single_s:
            finalize(pool)              # common case: single S tile, no accumulator
        else:
            pooled_ref = pooled_scratch[0]

            @pl.when(s == 0)
            def _():
                pooled_ref[...] = pool  # first S tile: plain store (no zero-init RMW)

            @pl.when(s > 0)
            def _():
                pooled_ref[...] += pool

            @pl.when(s == n_s - 1)
            def _():
                finalize(pooled_ref[...])


def bert_embedding(hidden_states, bert_lens, bert_mask, mix_weights, gamma,
                   proj_w, *, b_block=8, s_tile=512):
    """
    hidden_states: (B, L, S, H)  last n_layers BERT hidden states (pass bf16 to avoid
                                 an extra HBM cast pass; other float dtypes accepted)
    bert_lens    : (B, T) int32  #subwords per word (0 => padded word slot)
    bert_mask    : (B, S) bool   valid subword positions
    mix_weights  : (L,)   f32    ScalarMix raw weights
    gamma        :        float  ScalarMix gamma
    proj_w       : (n_out, H)    nn.Linear weight (PyTorch layout)
    returns      : (B, T, n_out) float32
    """
    B, L, S, H = hidden_states.shape
    T = bert_lens.shape[1]
    n_out = proj_w.shape[0]

    # --- glue: ScalarMix normalized weights (scalar prefetch -> SMEM) ---
    w = (jax.nn.softmax(mix_weights.astype(jnp.float32)) *
         jnp.float32(gamma)).astype(jnp.float32)                       # (L,)

    # --- glue: 0/1 subword->word indicator + exact f32 1/len scale ---
    lens = bert_lens.astype(jnp.int32)
    tok_mask = lens > 0                                                # == bert_lens.gt(0)
    starts = jnp.cumsum(lens, axis=1) - lens                           # exclusive prefix sum
    ends = starts + lens
    m = bert_mask.astype(jnp.int32)
    rank = jnp.cumsum(m, axis=1) - m                                   # index among masked subwords
    in_seg = ((rank[:, None, :] >= starts[:, :, None]) &
              (rank[:, None, :] < ends[:, :, None]) &
              bert_mask[:, None, :])
    A = in_seg.astype(jnp.bfloat16)                                    # (B, T, S) 0/1 exact
    inv_len = jnp.where(tok_mask,
                        1.0 / jnp.maximum(lens, 1).astype(jnp.float32),
                        0.0)[:, :, None]                               # (B, T, 1) f32

    # --- per-generation setup ---
    kind = jax.devices()[0].device_kind.lower()
    is_v5e = ("v5 lite" in kind) or ("v5e" in kind) or ("v5lite" in kind.replace(" ", ""))
    mix_dtype = jnp.float32 if is_v5e else jnp.bfloat16   # bf16 VALU mix only off v5e
    try:
        vmem_cap = int(pltpu.get_tpu_info().vmem_capacity_bytes)
    except Exception:
        vmem_cap = (64 << 20) if "v7" in kind else (128 << 20)
    vmem_budget = int(vmem_cap * 0.90)                    # headroom for Mosaic internals

    # --- tiling: lane-dense output, sublane-aligned T, S in 128-lane tiles ---
    T_pad = _round_up(T, 16)                  # bf16 sublane packing / free reshape
    Np = _round_up(n_out, 128)                # lane-dense output / full MXU N tile

    Bb = max(1, min(b_block, B))
    if B > 1:                                 # keep >= 2 batch blocks so the "parallel"
        Bb = min(Bb, (B + 1) // 2)            # axis can shard across v7x's two TCs
    tS = S if S <= s_tile else max(128, (s_tile // 128) * 128)

    mix_bytes = np.dtype(mix_dtype).itemsize

    def footprint(bb, ts):
        multi_s = _round_up(S, ts) > ts
        fp = 0
        fp += 2 * bb * ts * H * 2             # hid block (bf16), double-buffered
        fp += 2 * bb * T_pad * ts * 2         # A block (bf16), double-buffered
        fp += 1 * bb * T_pad * 4              # 1/len block (f32), single-buffered
        fp += 1 * H * Np * 2                  # proj block (bf16), single-buffered
        fp += 2 * bb * T_pad * Np * 4         # out block (f32), double-buffered
        fp += bb * ts * H * mix_bytes         # ScalarMix accumulator scratch
        if multi_s:
            fp += bb * T_pad * H * 4          # pooled accumulator scratch (f32)
        # in-kernel temporaries: bf16 copy of mix fed to MXU, f32 pool result,
        # bf16 scaled pool, f32 projection result
        fp += bb * ts * H * 2
        fp += bb * T_pad * H * (4 + 2)
        fp += bb * T_pad * Np * 4
        return fp

    # shrink Bb first (never T), then tS, until the footprint fits physical VMEM
    while footprint(Bb, tS) > vmem_budget and (Bb > 1 or tS > 128):
        if Bb > 1:
            Bb = max(1, Bb // 2)
        else:
            tS = max(128, (tS // 2) // 128 * 128)

    B_pad = _round_up(B, Bb)
    S_pad = _round_up(S, tS)
    single_s = (S_pad == tS)

    fp = footprint(Bb, tS)
    vmem_limit = int(max(fp * 1.25, 32 << 20))
    vmem_limit = min(vmem_limit, int(vmem_cap * 0.95))   # never above physical VMEM

    # --- inputs: avoid an extra HBM cast/pad pass whenever possible ---
    hid = hidden_states if hidden_states.dtype == jnp.bfloat16 \
        else hidden_states.astype(jnp.bfloat16)
    if B_pad != B or S_pad != S:
        hid = jnp.pad(hid, ((0, B_pad - B), (0, 0), (0, S_pad - S), (0, 0)))
    A = jnp.pad(A, ((0, B_pad - B), (0, T_pad - T), (0, S_pad - S)))
    inv_len = jnp.pad(inv_len, ((0, B_pad - B), (0, T_pad - T), (0, 0)))
    proj_t = jnp.pad(proj_w.T.astype(jnp.bfloat16), ((0, 0), (0, Np - n_out)))

    grid = (B_pad // Bb, S_pad // tS, L)      # reduction axes (S, then L) last

    scratch_shapes = [pltpu.VMEM((Bb, tS, H), mix_dtype)]
    if not single_s:
        scratch_shapes.append(pltpu.VMEM((Bb, T_pad, H), jnp.float32))

    kernel = functools.partial(_bert_embedding_kernel,
                               mix_dtype=mix_dtype, single_s=single_s)

    def run(single_buffer_invariants):
        inv_kw = dict(pipeline_mode=pl.Buffered(1)) if single_buffer_invariants else {}
        grid_spec = pltpu.PrefetchScalarGridSpec(
            num_scalar_prefetch=1,            # mix weights land in SMEM
            grid=grid,
            in_specs=[
                pl.BlockSpec((Bb, 1, tS, H), lambda b, s, l, w_r: (b, l, s, 0)),
                pl.BlockSpec((Bb, T_pad, tS), lambda b, s, l, w_r: (b, 0, s)),
                pl.BlockSpec((Bb, T_pad, 1), lambda b, s, l, w_r: (b, 0, 0), **inv_kw),
                pl.BlockSpec((H, Np), lambda b, s, l, w_r: (0, 0), **inv_kw),
            ],
            out_specs=pl.BlockSpec((Bb, T_pad, Np), lambda b, s, l, w_r: (b, 0, 0)),
            scratch_shapes=scratch_shapes)
        return pl.pallas_call(
            kernel,
            out_shape=jax.ShapeDtypeStruct((B_pad, T_pad, Np), jnp.float32),
            grid_spec=grid_spec,
            compiler_params=pltpu.CompilerParams(
                dimension_semantics=("parallel", "arbitrary", "arbitrary"),
                vmem_limit_bytes=vmem_limit),
        )(w, hid, A, inv_len, proj_t)

    try:
        out = run(True)       # loop-invariant operands single-buffered
    except Exception:
        out = run(False)      # fallback if this jax build rejects pl.Buffered(1)

    return out[:B, :T, :n_out]


def _reference_numpy(hidden, bert_lens, bert_mask, mix_w, gamma, proj_w):
    """Literal re-implementation of the PyTorch forward (post-BERT) in numpy/f32."""
    w = np.asarray(jax.nn.softmax(mix_w)) * gamma
    mixed = np.einsum("l,blsh->bsh", w, np.asarray(hidden, np.float32))  # ScalarMix
    B, S, H = mixed.shape
    T = bert_lens.shape[1]
    out = np.zeros((B, T, H), np.float32)
    for b in range(B):
        sub = mixed[b][np.asarray(bert_mask[b])]                         # bert[bert_mask]
        off = 0
        for t in range(T):
            l = int(bert_lens[b, t])
            if l > 0:                                                    # split + mean(0)
                out[b, t] = sub[off:off + l].mean(0)                     # masked_scatter_
                off += l
    return out @ np.asarray(proj_w, np.float32).T                        # projection


if __name__ == "__main__":
    B, T = 2, 8            # word-level batch / seq_len
    S = 256                # subword seq_len
    L = 4                  # n_layers mixed by ScalarMix
    H = 32                 # bert hidden_size
    N_OUT = 32             # projection output size

    key = jax.random.PRNGKey(0)
    k1, k2, k3 = jax.random.split(key, 3)

    hidden_f32 = jax.random.normal(k1, (B, L, S, H), jnp.float32)
    hidden_bf16 = hidden_f32.astype(jnp.bfloat16)   # producer-side bf16: no wrapper cast
    mix_weights = jax.random.normal(k2, (L,), jnp.float32)
    gamma = 1.0
    proj_w = 0.1 * jax.random.normal(k3, (N_OUT, H), jnp.float32)

    # deterministic subword lengths; per-batch sum(lens) == #True in bert_mask
    bert_lens = jnp.array([[2, 1, 3, 1, 2, 0, 0, 0],
                           [1, 2, 2, 1, 1, 1, 2, 0]], jnp.int32)
    n_sub = np.asarray(bert_lens).sum(axis=1)                            # [9, 10]
    bert_mask = jnp.array([[i < n_sub[b] for i in range(S)] for b in range(B)],
                          dtype=jnp.bool_)

    # reference starts from the same bf16-rounded hidden states the kernel sees;
    # remaining differences are in-kernel bf16 mix/matmul operands -> bf16 tolerance
    ref = _reference_numpy(np.asarray(hidden_bf16, np.float32),
                           np.asarray(bert_lens), np.asarray(bert_mask),
                           mix_weights, gamma, proj_w)

    # 1) single-S-tile path (S <= s_tile): pooled accumulator bypassed entirely
    out1 = jax.block_until_ready(
        bert_embedding(hidden_bf16, bert_lens, bert_mask, mix_weights, gamma,
                       proj_w, b_block=8, s_tile=512))
    np.testing.assert_allclose(np.asarray(out1), ref, rtol=2e-2, atol=2e-2)

    # 2) multi-S-tile path (S tiled at 128): S-axis accumulation in VMEM scratch
    out2 = jax.block_until_ready(
        bert_embedding(hidden_bf16, bert_lens, bert_mask, mix_weights, gamma,
                       proj_w, b_block=8, s_tile=128))
    np.testing.assert_allclose(np.asarray(out2), ref, rtol=2e-2, atol=2e-2)

    print("KERNEL_OK")
</pallas_src>

<mosaic_0001>
module attributes {stable_mosaic.version = 11 : i64} {
  func.func @_bert_embedding_kernel(%arg0: i32, %arg1: i32, %arg2: i32, %arg3: memref<4xf32, #tpu.memory_space<smem>>, %arg4: memref<1x1x256x32xbf16, #tpu.memory_space<vmem>>, %arg5: memref<1x16x256xbf16, #tpu.memory_space<vmem>>, %arg6: memref<1x16x1xf32, #tpu.memory_space<vmem>>, %arg7: memref<32x128xbf16, #tpu.memory_space<vmem>>, %arg8: memref<1x16x128xf32, #tpu.memory_space<vmem>>, %arg9: memref<1x256x32xbf16, #tpu.memory_space<vmem>>) attributes {dimension_semantics = [#tpu.dimension_semantics<parallel>, #tpu.dimension_semantics<arbitrary>, #tpu.dimension_semantics<arbitrary>], iteration_bounds = array<i64: 2, 1, 4>, scalar_prefetch = 1 : i64, scratch_operands = 1 : i64, tpu.core_type = #tpu.core_type<tc>, window_params = [{transform_indices = @transform_0, window_bounds = array<i64: 1, 1, 256, 32>}, {transform_indices = @transform_1, window_bounds = array<i64: 1, 16, 256>}, {pipeline_mode = #tpu.pipeline_mode<synchronous>, transform_indices = @transform_2, window_bounds = array<i64: 1, 16, 1>}, {pipeline_mode = #tpu.pipeline_mode<synchronous>, transform_indices = @transform_3, window_bounds = array<i64: 32, 128>}, {transform_indices = @transform_4, window_bounds = array<i64: 1, 16, 128>}]} {
    %0 = arith.index_cast %arg2 : i32 to index
    %1 = memref.load %arg3[%0] : memref<4xf32, #tpu.memory_space<smem>>
    %2 = arith.truncf %1 : f32 to bf16
    %c0 = arith.constant 0 : index
    %c0_0 = arith.constant 0 : index
    %c0_1 = arith.constant 0 : index
    %c0_2 = arith.constant 0 : index
    %3 = vector.load %arg4[%c0, %c0_0, %c0_1, %c0_2] : memref<1x1x256x32xbf16, #tpu.memory_space<vmem>>, vector<1x1x256x32xbf16>
    %4 = vector.shape_cast %3 : vector<1x1x256x32xbf16> to vector<1x256x32xbf16>
    %5 = vector.broadcast %2 : bf16 to vector<1x256x32xbf16>
    %6 = arith.mulf %5, %4 : vector<1x256x32xbf16>
    %c0_i32 = arith.constant 0 : i32
    %7 = arith.cmpi eq, %arg2, %c0_i32 : i32
    %8 = arith.extui %7 : i1 to i32
    %c0_i32_3 = arith.constant 0 : i32
    %9 = arith.cmpi ne, %8, %c0_i32_3 : i32
    scf.if %9 {
      %c0_7 = arith.constant 0 : index
      %c0_8 = arith.constant 0 : index
      %c0_9 = arith.constant 0 : index
      %16 = vector.load %arg9[%c0_7, %c0_8, %c0_9] : memref<1x256x32xbf16, #tpu.memory_space<vmem>>, vector<1x256x32xbf16>
      tpu.vector_store %arg9[%c0_7, %c0_8, %c0_9], %6 {strides = array<i32>} : memref<1x256x32xbf16, #tpu.memory_space<vmem>>, vector<1x256x32xbf16>,
    } else {
    }
    %c0_i32_4 = arith.constant 0 : i32
    %10 = arith.cmpi sgt, %arg2, %c0_i32_4 : i32
    %11 = arith.extui %10 : i1 to i32
    %c0_i32_5 = arith.constant 0 : i32
    %12 = arith.cmpi ne, %11, %c0_i32_5 : i32
    scf.if %12 {
      %c0_7 = arith.constant 0 : index
      %c0_8 = arith.constant 0 : index
      %c0_9 = arith.constant 0 : index
      %16 = vector.load %arg9[%c0_7, %c0_8, %c0_9] : memref<1x256x32xbf16, #tpu.memory_space<vmem>>, vector<1x256x32xbf16>
      %17 = arith.addf %16, %6 : vector<1x256x32xbf16>
      %c0_10 = arith.constant 0 : index
      %c0_11 = arith.constant 0 : index
      %c0_12 = arith.constant 0 : index
      %18 = vector.load %arg9[%c0_10, %c0_11, %c0_12] : memref<1x256x32xbf16, #tpu.memory_space<vmem>>, vector<1x256x32xbf16>
      tpu.vector_store %arg9[%c0_10, %c0_11, %c0_12], %17 {strides = array<i32>} : memref<1x256x32xbf16, #tpu.memory_space<vmem>>, vector<1x256x32xbf16>,
    } else {
    }
    %c3_i32 = arith.constant 3 : i32
    %13 = arith.cmpi eq, %arg2, %c3_i32 : i32
    %14 = arith.extui %13 : i1 to i32
    %c0_i32_6 = arith.constant 0 : i32
    %15 = arith.cmpi ne, %14, %c0_i32_6 : i32
    scf.if %15 {
      %c0_7 = arith.constant 0 : index
      %c0_8 = arith.constant 0 : index
      %c0_9 = arith.constant 0 : index
      %16 = vector.load %arg5[%c0_7, %c0_8, %c0_9] : memref<1x16x256xbf16, #tpu.memory_space<vmem>>, vector<1x16x256xbf16>
      %c0_10 = arith.constant 0 : index
      %c0_11 = arith.constant 0 : index
      %c0_12 = arith.constant 0 : index
      %17 = vector.load %arg9[%c0_10, %c0_11, %c0_12] : memref<1x256x32xbf16, #tpu.memory_space<vmem>>, vector<1x256x32xbf16>
      "tpu.trace_start"() <{level = 10 : i32, message = "bts,bsh->bth"}> : () -> ()
      %cst = arith.constant dense<0.000000e+00> : vector<1x16x32xf32>
      %18 = tpu.matmul %16, %17, %cst {dimension_numbers = #tpu.dot_dimension_numbers<[2], [1], [1], [2], [0, 0, 0, 1, 1, 2], [0], [0]>} : vector<1x16x256xbf16>, vector<1x256x32xbf16>, vector<1x16x32xf32> -> vector<1x16x32xf32>
      "tpu.trace_stop"() : () -> ()
      %c0_13 = arith.constant 0 : index
      %c0_14 = arith.constant 0 : index
      %c0_15 = arith.constant 0 : index
      %19 = vector.load %arg6[%c0_13, %c0_14, %c0_15] : memref<1x16x1xf32, #tpu.memory_space<vmem>>, vector<1x16x1xf32>
      %20 = vector.broadcast %19 : vector<1x16x1xf32> to vector<1x16x32xf32>
      %21 = arith.mulf %18, %20 : vector<1x16x32xf32>
      %22 = arith.truncf %21 : vector<1x16x32xf32> to vector<1x16x32xbf16>
      %23 = vector.shape_cast %22 : vector<1x16x32xbf16> to vector<16x32xbf16>
      %c0_16 = arith.constant 0 : index
      %c0_17 = arith.constant 0 : index
      %24 = vector.load %arg7[%c0_16, %c0_17] : memref<32x128xbf16, #tpu.memory_space<vmem>>, vector<32x128xbf16>
      %cst_18 = arith.constant dense<0.000000e+00> : vector<16x128xf32>
      %25 = tpu.matmul %23, %24, %cst_18 {dimension_numbers = #tpu.dot_dimension_numbers<[1], [0], [0], [1], [0, 0, 1, 1], [], []>} : vector<16x32xbf16>, vector<32x128xbf16>, vector<16x128xf32> -> vector<16x128xf32>
      %26 = vector.shape_cast %25 : vector<16x128xf32> to vector<1x16x128xf32>
      %c0_19 = arith.constant 0 : index
      %c0_20 = arith.constant 0 : index
      %c0_21 = arith.constant 0 : index
      %27 = vector.load %arg8[%c0_19, %c0_20, %c0_21] : memref<1x16x128xf32, #tpu.memory_space<vmem>>, vector<1x16x128xf32>
      tpu.vector_store %arg8[%c0_19, %c0_20, %c0_21], %26 {strides = array<i32>} : memref<1x16x128xf32, #tpu.memory_space<vmem>>, vector<1x16x128xf32>,
    } else {
    }
    return
  }
  func.func @transform_0(%arg0: i32, %arg1: i32, %arg2: i32, %arg3: memref<4xf32, #tpu.memory_space<smem>>) -> (i32, i32, i32, i32) {
    %c0_i32 = arith.constant 0 : i32
    %c0_i32_0 = arith.constant 0 : i32
    return %arg0, %arg2, %arg1, %c0_i32 : i32, i32, i32, i32
  }
  func.func @transform_1(%arg0: i32, %arg1: i32, %arg2: i32, %arg3: memref<4xf32, #tpu.memory_space<smem>>) -> (i32, i32, i32) {
    %c0_i32 = arith.constant 0 : i32
    %c0_i32_0 = arith.constant 0 : i32
    return %arg0, %c0_i32, %arg1 : i32, i32, i32
  }
  func.func @transform_2(%arg0: i32, %arg1: i32, %arg2: i32, %arg3: memref<4xf32, #tpu.memory_space<smem>>) -> (i32, i32, i32) {
    %c0_i32 = arith.constant 0 : i32
    %c0_i32_0 = arith.constant 0 : i32
    %c0_i32_1 = arith.constant 0 : i32
    return %arg0, %c0_i32, %c0_i32_0 : i32, i32, i32
  }
  func.func @transform_3(%arg0: i32, %arg1: i32, %arg2: i32, %arg3: memref<4xf32, #tpu.memory_space<smem>>) -> (i32, i32) {
    %c0_i32 = arith.constant 0 : i32
    %c0_i32_0 = arith.constant 0 : i32
    %c0_i32_1 = arith.constant 0 : i32
    return %c0_i32, %c0_i32_0 : i32, i32
  }
  func.func @transform_4(%arg0: i32, %arg1: i32, %arg2: i32, %arg3: memref<4xf32, #tpu.memory_space<smem>>) -> (i32, i32, i32) {
    %c0_i32 = arith.constant 0 : i32
    %c0_i32_0 = arith.constant 0 : i32
    %c0_i32_1 = arith.constant 0 : i32
    return %arg0, %c0_i32, %c0_i32_0 : i32, i32, i32
  }
}

module attributes {stable_mosaic.version = 11 : i64} {
  func.func @_bert_embedding_kernel(%arg0: i32, %arg1: i32, %arg2: i32, %arg3: memref<4xf32, #tpu.memory_space<smem>>, %arg4: memref<1x1x256x32xbf16, #tpu.memory_space<vmem>>, %arg5: memref<1x16x256xbf16, #tpu.memory_space<vmem>>, %arg6: memref<1x16x1xf32, #tpu.memory_space<vmem>>, %arg7: memref<32x128xbf16, #tpu.memory_space<vmem>>, %arg8: memref<1x16x128xf32, #tpu.memory_space<vmem>>, %arg9: memref<1x256x32xbf16, #tpu.memory_space<vmem>>) attributes {dimension_semantics = [#tpu.dimension_semantics<parallel>, #tpu.dimension_semantics<arbitrary>, #tpu.dimension_semantics<arbitrary>], iteration_bounds = array<i64: 2, 1, 4>, scalar_prefetch = 1 : i64, scratch_operands = 1 : i64, tpu.core_type = #tpu.core_type<tc>, window_params = [{transform_indices = @transform_0, window_bounds = array<i64: 1, 1, 256, 32>}, {transform_indices = @transform_1, window_bounds = array<i64: 1, 16, 256>}, {transform_indices = @transform_2, window_bounds = array<i64: 1, 16, 1>}, {pipeline_mode = #tpu.pipeline_mode<synchronous>, transform_indices = @transform_3, window_bounds = array<i64: 32, 128>}, {transform_indices = @transform_4, window_bounds = array<i64: 1, 16, 128>}]} {
    %0 = arith.index_cast %arg2 : i32 to index
    %1 = memref.load %arg3[%0] : memref<4xf32, #tpu.memory_space<smem>>
    %2 = arith.truncf %1 : f32 to bf16
    %c0 = arith.constant 0 : index
    %c0_0 = arith.constant 0 : index
    %c0_1 = arith.constant 0 : index
    %c0_2 = arith.constant 0 : index
    %3 = vector.load %arg4[%c0, %c0_0, %c0_1, %c0_2] : memref<1x1x256x32xbf16, #tpu.memory_space<vmem>>, vector<1x1x256x32xbf16>
    %4 = vector.shape_cast %3 : vector<1x1x256x32xbf16> to vector<1x256x32xbf16>
    %5 = vector.broadcast %2 : bf16 to vector<1x256x32xbf16>
    %6 = arith.mulf %5, %4 : vector<1x256x32xbf16>
    %c0_i32 = arith.constant 0 : i32
    %7 = arith.cmpi eq, %arg2, %c0_i32 : i32
    %8 = arith.extui %7 : i1 to i32
    %c0_i32_3 = arith.constant 0 : i32
    %9 = arith.cmpi ne, %8, %c0_i32_3 : i32
    scf.if %9 {
      %c0_7 = arith.constant 0 : index
      %c0_8 = arith.constant 0 : index
      %c0_9 = arith.constant 0 : index
      %16 = vector.load %arg9[%c0_7, %c0_8, %c0_9] : memref<1x256x32xbf16, #tpu.memory_space<vmem>>, vector<1x256x32xbf16>
      tpu.vector_store %arg9[%c0_7, %c0_8, %c0_9], %6 {strides = array<i32>} : memref<1x256x32xbf16, #tpu.memory_space<vmem>>, vector<1x256x32xbf16>,
    } else {
    }
    %c0_i32_4 = arith.constant 0 : i32
    %10 = arith.cmpi sgt, %arg2, %c0_i32_4 : i32
    %11 = arith.extui %10 : i1 to i32
    %c0_i32_5 = arith.constant 0 : i32
    %12 = arith.cmpi ne, %11, %c0_i32_5 : i32
    scf.if %12 {
      %c0_7 = arith.constant 0 : index
      %c0_8 = arith.constant 0 : index
      %c0_9 = arith.constant 0 : index
      %16 = vector.load %arg9[%c0_7, %c0_8, %c0_9] : memref<1x256x32xbf16, #tpu.memory_space<vmem>>, vector<1x256x32xbf16>
      %17 = arith.addf %16, %6 : vector<1x256x32xbf16>
      %c0_10 = arith.constant 0 : index
      %c0_11 = arith.constant 0 : index
      %c0_12 = arith.constant 0 : index
      %18 = vector.load %arg9[%c0_10, %c0_11, %c0_12] : memref<1x256x32xbf16, #tpu.memory_space<vmem>>, vector<1x256x32xbf16>
      tpu.vector_store %arg9[%c0_10, %c0_11, %c0_12], %17 {strides = array<i32>} : memref<1x256x32xbf16, #tpu.memory_space<vmem>>, vector<1x256x32xbf16>,
    } else {
    }
    %c3_i32 = arith.constant 3 : i32
    %13 = arith.cmpi eq, %arg2, %c3_i32 : i32
    %14 = arith.extui %13 : i1 to i32
    %c0_i32_6 = arith.constant 0 : i32
    %15 = arith.cmpi ne, %14, %c0_i32_6 : i32
    scf.if %15 {
      %c0_7 = arith.constant 0 : index
      %c0_8 = arith.constant 0 : index
      %c0_9 = arith.constant 0 : index
      %16 = vector.load %arg5[%c0_7, %c0_8, %c0_9] : memref<1x16x256xbf16, #tpu.memory_space<vmem>>, vector<1x16x256xbf16>
      %c0_10 = arith.constant 0 : index
      %c0_11 = arith.constant 0 : index
      %c0_12 = arith.constant 0 : index
      %17 = vector.load %arg9[%c0_10, %c0_11, %c0_12] : memref<1x256x32xbf16, #tpu.memory_space<vmem>>, vector<1x256x32xbf16>
      "tpu.trace_start"() <{level = 10 : i32, message = "bts,bsh->bth"}> : () -> ()
      %cst = arith.constant dense<0.000000e+00> : vector<1x16x32xf32>
      %18 = tpu.matmul %16, %17, %cst {dimension_numbers = #tpu.dot_dimension_numbers<[2], [1], [1], [2], [0, 0, 0, 1, 1, 2], [0], [0]>} : vector<1x16x256xbf16>, vector<1x256x32xbf16>, vector<1x16x32xf32> -> vector<1x16x32xf32>
      "tpu.trace_stop"() : () -> ()
      %c0_13 = arith.constant 0 : index
      %c0_14 = arith.constant 0 : index
      %c0_15 = arith.constant 0 : index
      %19 = vector.load %arg6[%c0_13, %c0_14, %c0_15] : memref<1x16x1xf32, #tpu.memory_space<vmem>>, vector<1x16x1xf32>
      %20 = vector.broadcast %19 : vector<1x16x1xf32> to vector<1x16x32xf32>
      %21 = arith.mulf %18, %20 : vector<1x16x32xf32>
      %22 = arith.truncf %21 : vector<1x16x32xf32> to vector<1x16x32xbf16>
      %23 = vector.shape_cast %22 : vector<1x16x32xbf16> to vector<16x32xbf16>
      %c0_16 = arith.constant 0 : index
      %c0_17 = arith.constant 0 : index
      %24 = vector.load %arg7[%c0_16, %c0_17] : memref<32x128xbf16, #tpu.memory_space<vmem>>, vector<32x128xbf16>
      %cst_18 = arith.constant dense<0.000000e+00> : vector<16x128xf32>
      %25 = tpu.matmul %23, %24, %cst_18 {dimension_numbers = #tpu.dot_dimension_numbers<[1], [0], [0], [1], [0, 0, 1, 1], [], []>} : vector<16x32xbf16>, vector<32x128xbf16>, vector<16x128xf32> -> vector<16x128xf32>
      %26 = vector.shape_cast %25 : vector<16x128xf32> to vector<1x16x128xf32>
      %c0_19 = arith.constant 0 : index
      %c0_20 = arith.constant 0 : index
      %c0_21 = arith.constant 0 : index
      %27 = vector.load %arg8[%c0_19, %c0_20, %c0_21] : memref<1x16x128xf32, #tpu.memory_space<vmem>>, vector<1x16x128xf32>
      tpu.vector_store %arg8[%c0_19, %c0_20, %c0_21], %26 {strides = array<i32>} : memref<1x16x128xf32, #tpu.memory_space<vmem>>, vector<1x16x128xf32>,
    } else {
    }
    return
  }
  func.func @transform_0(%arg0: i32, %arg1: i32, %arg2: i32, %arg3: memref<4xf32, #tpu.memory_space<smem>>) -> (i32, i32, i32, i32) {
    %c0_i32 = arith.constant 0 : i32
    %c0_i32_0 = arith.constant 0 : i32
    return %arg0, %arg2, %arg1, %c0_i32 : i32, i32, i32, i32
  }
  func.func @transform_1(%arg0: i32, %arg1: i32, %arg2: i32, %arg3: memref<4xf32, #tpu.memory_space<smem>>) -> (i32, i32, i32) {
    %c0_i32 = arith.constant 0 : i32
    %c0_i32_0 = arith.constant 0 : i32
    return %arg0, %c0_i32, %arg1 : i32, i32, i32
  }
  func.func @transform_2(%arg0: i32, %arg1: i32, %arg2: i32, %arg3: memref<4xf32, #tpu.memory_space<smem>>) -> (i32, i32, i32) {
    %c0_i32 = arith.constant 0 : i32
    %c0_i32_0 = arith.constant 0 : i32
    %c0_i32_1 = arith.constant 0 : i32
    return %arg0, %c0_i32, %c0_i32_0 : i32, i32, i32
  }
  func.func @transform_3(%arg0: i32, %arg1: i32, %arg2: i32, %arg3: memref<4xf32, #tpu.memory_space<smem>>) -> (i32, i32) {
    %c0_i32 = arith.constant 0 : i32
    %c0_i32_0 = arith.constant 0 : i32
    %c0_i32_1 = arith.constant 0 : i32
    return %c0_i32, %c0_i32_0 : i32, i32
  }
  func.func @transform_4(%arg0: i32, %arg1: i32, %arg2: i32, %arg3: memref<4xf32, #tpu.memory_space<smem>>) -> (i32, i32, i32) {
    %c0_i32 = arith.constant 0 : i32
    %c0_i32_0 = arith.constant 0 : i32
    %c0_i32_1 = arith.constant 0 : i32
    return %arg0, %c0_i32, %c0_i32_0 : i32, i32, i32
  }
}

</mosaic_0001>

<llo_original>
// kernel: tpu_custom_call.1
$region0: #{tpu_custom_call.1}
  #allocation0 [shape = 'u32[]', space=smem, size = 0x4, offset = 0x4, fixed_abs, tag = 'smem constant byte address 0x4 - core index']
  #allocation1 [shape = 'u32[144,128]{1,0:T(1,128)}', space=vmem, size = 0x12000, scoped, tag = 'internal scratch']
  #allocation2 [shape = 'bf16[1,256,32]{2,1,0:T(16,128)(2,1)}', space=vmem, size = 0x10000, scoped, tag = 'scratch operand']
  #allocation3 [shape = 's32[1]{0}', space=sflag, size = 0x4, scoped, tag = 'scoped memory for tpu_custom_call.1']
  #allocation4 [shape = 'u8[512]{0}', space=smem, size = 0x200, scoped, tag = 'prefetched SMEM operand 0']
  %s0 = inlined_call_operand.vmem [shape: f32[4], index: 0, kind: input, shape index: {}]
  %s1 = inlined_call_operand.vmem [shape: bf16[2,4,256,32], index: 1, kind: input, shape index: {}]
  %s2 = inlined_call_operand.vmem [shape: bf16[2,16,256], index: 2, kind: input, shape index: {}]
  %s3 = inlined_call_operand.vmem [shape: f32[2,16,1], index: 3, kind: input, shape index: {}]
  %s4 = inlined_call_operand.vmem [shape: bf16[32,128], index: 4, kind: input, shape index: {}]
  %s5 = inlined_call_operand.hbm [shape: f32[2,16,128], index: 5, kind: output, shape index: {}]
  %s6 = sld [smem:[#allocation0]]
  $region61: #{tpu_custom_call.1} parent=0
    _
  %s8 = ssub.s32 1, %s6
  %s9 = scalar_select 0, %s8, %s6
  %s10 = sshll.u32 %s0, 4
  %s11 = int_to_ptr.vmem [resolvable:$true] %s10
  %13 = dma.vmem_to_smem %s11, 16, [#allocation4], [#allocation3]
  %14 = dma.done [#allocation3], 16
  %15 = sfence
  $region1: #{tpu_custom_call.1} parent=0
    #allocation5 [shape = 'u8[16384]{0}', space=vmem, size = 0x4000, scoped, tag = 'output window, operand 0']
    #allocation6 [shape = 's32[2]{0}', space=sflag, size = 0x8, scoped, tag = 'scoped memory for tpu_custom_call.1']
    %16 = vsyncpa [#allocation6], 0
    %s17 = scalar_lea.sflag [#allocation6], 1
    %18 = vsyncpa %s17, 0
    loop: start=0, step=1, limit=10
    $region2: #{tpu_custom_call.1} parent=1 // loop_pre_header
      _
    $region3: #{tpu_custom_call.1} parent=1 // loop_header
      %s20 = sphi 0, %s24
      %p21 = scmp.ge.s32.totalorder %s20, 10
      %s27 = sphi 0, %s46
      %s28 = sphi 0, %s42
      %s29 = sphi 0, %s38
      %s30 = sphi 0, %s27
      %s31 = sphi 0, %s28
      %s32 = sphi 0, %s29
      %s33 = sphi 0, %s30
      %s34 = sphi 0, %s31
      %s35 = sphi 0, %s32
      %s53 = sphi 0, %s55
      %s56 = sphi 0, %s53
      %s57 = sphi 0, %s56
      %s73 = sphi 0, %s57
      %s81 = sphi 0, %s83
      %s84 = sphi 0, %s81
      %s85 = sphi 0, %s84
      %s101 = sphi 0, %s85
      %s107 = sphi 0, %s109
      %s110 = sphi 0, %s107
      %s111 = sphi 0, %s110
      %s127 = sphi 0, %s111
      %s131 = sphi 0, %s131
      %s133 = sphi 0, %s131
      %s134 = sphi 0, %s133
      %s148 = sphi 0, %s134
      %s154 = sphi 0, %s156
      %s157 = sphi 0, %s154
      %s158 = sphi 0, %s157
      %s174 = sphi 0, %s158
    $region4: #{tpu_custom_call.1} parent=1 // loop_header_branch
      %23 = sbr.rel (%p21) target = $region8
    $region5: #{tpu_custom_call.1} parent=1 // loop_body
      %s25 = ssub.s32 %s20, 1
      %s26 = ssub.s32 %s20, 2
      %s36 = sadd.s32 1, %s29
      %p37 = scmp.ge.s32.totalorder %s36, 4
      %s38 = scalar_select %p37, 0, %s36
      %s39 = sadd.s32 1, %s28
      %s40 = scalar_select %p37, %s39, %s28
      %p41 = scmp.ge.s32.totalorder %s40, 1
      %s42 = scalar_select %p41, 0, %s40
      %s43 = sadd.s32 1, %s27
      %s44 = scalar_select %p41, %s43, %s27
      %p45 = scmp.ge.s32.totalorder %s44, 2
      %s46 = scalar_select %p45, 0, %s44
      %s47 = ssub.s32 %s27, %s46
      %s48 = ssub.s32 %s29, %s38
      %s49 = sor.u32 %s47, %s48
      %s50 = ssub.s32 %s28, %s42
      %s51 = sor.u32 %s49, %s50
      %p52 = scmp.eq.s32.totalorder %s51, 0
      %s54 = sadd.s32 %s53, 1
      %s55 = scalar_select %p52, %s53, %s54
      %p58 = pneg %p52
      %p59 = scmp.eq.s32.totalorder %s20, 7
      %p60 = por %p58, %p59
      %p61 = scmp.ne.s32.totalorder %s53, %s56
      %p62 = scmp.eq.s32.totalorder %s20, 0
      %p63 = por %p61, %p62
      %p64 = scmp.ne.s32.totalorder %s53, %s56
      %p65 = scmp.eq.s32.totalorder %s25, 7
      %p66 = por %p64, %p65
      %p67 = scmp.ne.s32.totalorder %s56, %s57
      %p68 = scmp.eq.s32.totalorder %s25, 0
      %p69 = por %p67, %p68
      %p70 = scmp.ne.s32.totalorder %s56, %s57
      %p71 = scmp.eq.s32.totalorder %s26, 7
      %p72 = por %p70, %p71
      %p74 = scmp.ne.s32.totalorder %s57, %s73
      %p75 = scmp.eq.s32.totalorder %s26, 0
      %p76 = por %p74, %p75
      %s77 = ssub.s32 %s27, %s46
      %s78 = ssub.s32 %s28, %s42
      %s79 = sor.u32 %s77, %s78
      %p80 = scmp.eq.s32.totalorder %s79, 0
      %s82 = sadd.s32 %s81, 1
      %s83 = scalar_select %p80, %s81, %s82
      %p86 = pneg %p80
      %p87 = scmp.eq.s32.totalorder %s20, 7
      %p88 = por %p86, %p87
      %p89 = scmp.ne.s32.totalorder %s81, %s84
      %p90 = scmp.eq.s32.totalorder %s20, 0
      %p91 = por %p89, %p90
      %p92 = scmp.ne.s32.totalorder %s81, %s84
      %p93 = scmp.eq.s32.totalorder %s25, 7
      %p94 = por %p92, %p93
      %p95 = scmp.ne.s32.totalorder %s84, %s85
      %p96 = scmp.eq.s32.totalorder %s25, 0
      %p97 = por %p95, %p96
      %p98 = scmp.ne.s32.totalorder %s84, %s85
      %p99 = scmp.eq.s32.totalorder %s26, 7
      %p100 = por %p98, %p99
      %p102 = scmp.ne.s32.totalorder %s85, %s101
      %p103 = scmp.eq.s32.totalorder %s26, 0
      %p104 = por %p102, %p103
      %s105 = ssub.s32 %s27, %s46
      %p106 = scmp.eq.s32.totalorder %s105, 0
      %s108 = sadd.s32 %s107, 1
      %s109 = scalar_select %p106, %s107, %s108
      %p112 = pneg %p106
      %p113 = scmp.eq.s32.totalorder %s20, 7
      %p114 = por %p112, %p113
      %p115 = scmp.ne.s32.totalorder %s107, %s110
      %p116 = scmp.eq.s32.totalorder %s20, 0
      %p117 = por %p115, %p116
      %p118 = scmp.ne.s32.totalorder %s107, %s110
      %p119 = scmp.eq.s32.totalorder %s25, 7
      %p120 = por %p118, %p119
      %p121 = scmp.ne.s32.totalorder %s110, %s111
      %p122 = scmp.eq.s32.totalorder %s25, 0
      %p123 = por %p121, %p122
      %p124 = scmp.ne.s32.totalorder %s110, %s111
      %p125 = scmp.eq.s32.totalorder %s26, 7
      %p126 = por %p124, %p125
      %p128 = scmp.ne.s32.totalorder %s111, %s127
      %p129 = scmp.eq.s32.totalorder %s26, 0
      %p130 = por %p128, %p129
      %s132 = sadd.s32 %s131, 1
      %p135 = scmp.eq.s32.totalorder %s20, 7
      %p136 = scmp.ne.s32.totalorder %s131, %s133
      %p137 = scmp.eq.s32.totalorder %s20, 0
      %p138 = por %p136, %p137
      %p139 = scmp.ne.s32.totalorder %s131, %s133
      %p140 = scmp.eq.s32.totalorder %s25, 7
      %p141 = por %p139, %p140
      %p142 = scmp.ne.s32.totalorder %s133, %s134
      %p143 = scmp.eq.s32.totalorder %s25, 0
      %p144 = por %p142, %p143
      %p145 = scmp.ne.s32.totalorder %s133, %s134
      %p146 = scmp.eq.s32.totalorder %s26, 7
      %p147 = por %p145, %p146
      %p149 = scmp.ne.s32.totalorder %s134, %s148
      %p150 = scmp.eq.s32.totalorder %s26, 0
      %p151 = por %p149, %p150
      %s152 = ssub.s32 %s27, %s46
      %p153 = scmp.eq.s32.totalorder %s152, 0
      %s155 = sadd.s32 %s154, 1
      %s156 = scalar_select %p153, %s154, %s155
      %p159 = pneg %p153
      %p160 = scmp.eq.s32.totalorder %s20, 7
      %p161 = por %p159, %p160
      %p162 = scmp.ne.s32.totalorder %s154, %s157
      %p163 = scmp.eq.s32.totalorder %s20, 0
      %p164 = por %p162, %p163
      %p165 = scmp.ne.s32.totalorder %s154, %s157
      %p166 = scmp.eq.s32.totalorder %s25, 7
      %p167 = por %p165, %p166
      %p168 = scmp.ne.s32.totalorder %s157, %s158
      %p169 = scmp.eq.s32.totalorder %s25, 0
      %p170 = por %p168, %p169
      %p171 = scmp.ne.s32.totalorder %s157, %s158
      %p172 = scmp.eq.s32.totalorder %s26, 7
      %p173 = por %p171, %p172
      %p175 = scmp.ne.s32.totalorder %s158, %s174
      %p176 = scmp.eq.s32.totalorder %s26, 0
      %p177 = por %p175, %p176
      %p178 = scmp.le.s32.totalorder 1, %s20
      %p179 = scmp.lt.s32.totalorder %s20, 9
      %p180 = pnand %p178, %p179
      %p181 = pneg %p180
      // Predicated region
      $region9: #{tpu_custom_call.1} parent=5 // pred_check
        _
      $region10: #{tpu_custom_call.1} parent=5 // pred_check_branch
        %183 = sbr.rel (%p180) target = $region12
      $region11: #{tpu_custom_call.1} parent=5 // pred_region
        %s184 = ssub.s32 %s20, 1
        // Predicated region
        $region13: #{tpu_custom_call.1} parent=11 // pred_check
          %p185 = pneg %p123
        $region14: #{tpu_custom_call.1} parent=11 // pred_check_branch
          %187 = sbr.rel (%p185) target = $region16
        $region15: #{tpu_custom_call.1} parent=11 // pred_region
          %p188 = scmp.lt.s32.totalorder %s30, 1
          %s189 = scalar_select %p188, %s30, 1
          %s190 = smul.addr %s189, 2
          %s191 = smul.addr %s190, 8
          %s192 = scalar_lea.vmem %s3, %s191
        $region16: #{tpu_custom_call.1} parent=11 // pred_fallthru
          _
        // Predicated region
        $region17: #{tpu_custom_call.1} parent=11 // pred_check
          %p193 = pneg %p144
        $region18: #{tpu_custom_call.1} parent=11 // pred_check_branch
          %195 = sbr.rel (%p193) target = $region20
        $region19: #{tpu_custom_call.1} parent=11 // pred_region
          _
        $region20: #{tpu_custom_call.1} parent=11 // pred_fallthru
          _
      $region12: #{tpu_custom_call.1} parent=5 // pred_fallthru
        _
      %p196 = scmp.lt.s32.totalorder %s20, 8
      // Predicated region
      $region21: #{tpu_custom_call.1} parent=5 // pred_check
        %p197 = pneg %p196
      $region22: #{tpu_custom_call.1} parent=5 // pred_check_branch
        %199 = sbr.rel (%p197) target = $region24
      $region23: #{tpu_custom_call.1} parent=5 // pred_region
        // Predicated region
        $region25: #{tpu_custom_call.1} parent=23 // pred_check
          %p200 = pneg %p63
        $region26: #{tpu_custom_call.1} parent=23 // pred_check_branch
          %202 = sbr.rel (%p200) target = $region28
        $region27: #{tpu_custom_call.1} parent=23 // pred_region
          %s203 = smul.u32 32, %s28
          %p204 = scmp.lt.s32.totalorder %s27, 1
          %s205 = scalar_select %p204, %s27, 1
          %p206 = scmp.lt.s32.totalorder %s29, 3
          %s207 = scalar_select %p206, %s29, 3
          %p208 = scmp.lt.s32.totalorder %s203, 31
          %s209 = scalar_select %p208, %s203, 31
          %s210 = smul.addr %s207, 32
          %s211 = sadd.s32 %s209, %s210
          %s212 = smul.addr %s205, 128
          %s213 = sadd.s32 %s211, %s212
          %s214 = smul.addr %s213, 4
          %s215 = scalar_lea.vmem %s1, %s214
          %s216 = smul.u32 32, %s28
        $region28: #{tpu_custom_call.1} parent=23 // pred_fallthru
          _
        // Predicated region
        $region29: #{tpu_custom_call.1} parent=23 // pred_check
          %p217 = pneg %p91
        $region30: #{tpu_custom_call.1} parent=23 // pred_check_branch
          %219 = sbr.rel (%p217) target = $region32
        $region31: #{tpu_custom_call.1} parent=23 // pred_region
          %s220 = smul.u32 2, %s28
          %p221 = scmp.lt.s32.totalorder %s27, 1
          %s222 = scalar_select %p221, %s27, 1
          %p223 = scmp.lt.s32.totalorder %s220, 1
          %s224 = scalar_select %p223, %s220, 1
          %s225 = smul.addr %s222, 4
          %s226 = sadd.s32 %s224, %s225
          %s227 = smul.addr %s226, 4
          %s228 = scalar_lea.vmem %s2, %s227
          %s229 = smul.u32 2, %s28
        $region32: #{tpu_custom_call.1} parent=23 // pred_fallthru
          _
      $region24: #{tpu_custom_call.1} parent=5 // pred_fallthru
        _
      %p230 = scmp.le.s32.totalorder 1, %s20
      %p231 = scmp.lt.s32.totalorder %s20, 9
      %p232 = pnand %p230, %p231
      %p233 = pneg %p232
      // Predicated region
      $region33: #{tpu_custom_call.1} parent=5 // pred_check
        _
      $region34: #{tpu_custom_call.1} parent=5 // pred_check_branch
        %235 = sbr.rel (%p232) target = $region36
      $region35: #{tpu_custom_call.1} parent=5 // pred_region
        %s236 = ssub.s32 %s20, 1
        %s237 = smul.u32 32, %s31
        %p238 = scmp.lt.s32.totalorder %s30, 1
        %s239 = scalar_select %p238, %s30, 1
        %p240 = scmp.lt.s32.totalorder %s32, 3
        %s241 = scalar_select %p240, %s32, 3
        %p242 = scmp.lt.s32.totalorder %s237, 31
        %s243 = scalar_select %p242, %s237, 31
        %s244 = smul.addr %s241, 32
        %s245 = sadd.s32 %s243, %s244
        %s246 = smul.addr %s239, 128
        %s247 = sadd.s32 %s245, %s246
        %s248 = smul.addr %s247, 4
        %s249 = scalar_lea.vmem %s1, %s248
        %p250 = pneg %p69
        %p251 = pneg %p66
        %s252 = smul.u32 2, %s31
        %p253 = scmp.lt.s32.totalorder %s30, 1
        %s254 = scalar_select %p253, %s30, 1
        %p255 = scmp.lt.s32.totalorder %s252, 1
        %s256 = scalar_select %p255, %s252, 1
        %s257 = smul.addr %s254, 4
        %s258 = sadd.s32 %s256, %s257
        %s259 = smul.addr %s258, 4
        %s260 = scalar_lea.vmem %s2, %s259
        %p261 = pneg %p97
        %p262 = pneg %p94
        %p263 = scmp.lt.s32.totalorder %s30, 1
        %s264 = scalar_select %p263, %s30, 1
        %s265 = smul.addr %s264, 2
        %s266 = smul.addr %s265, 8
        %s267 = scalar_lea.vmem %s3, %s266
        %p268 = pneg %p123
        %p269 = pneg %p120
        %p270 = pneg %p144
        %p271 = pneg %p141
        %p272 = pneg %p170
        %p273 = pneg %p167
        %s274 = sand.u32 %s157, 1
        %s275 = scalar_lea.sflag [#allocation6], %s274
        %s276 = sand.u32 %s157, 1
        %s277 = smul.addr %s276, 16
        %s278 = scalar_lea.vmem [#allocation5], %s277
        %s279 = smul.u32 32, %s31
        %p280 = scmp.lt.s32.totalorder %s30, 1
        %s281 = scalar_select %p280, %s30, 1
        %p282 = scmp.lt.s32.totalorder %s32, 3
        %s283 = scalar_select %p282, %s32, 3
        %p284 = scmp.lt.s32.totalorder %s279, 31
        %s285 = scalar_select %p284, %s279, 31
        %s286 = smul.addr %s283, 32
        %s287 = sadd.s32 %s285, %s286
        %s288 = smul.addr %s281, 128
        %s289 = sadd.s32 %s287, %s288
        %s290 = smul.addr %s289, 4
        %s291 = scalar_lea.vmem %s1, %s290
        %s292 = smul.u32 32, %s31
        %s293 = smul.u32 2, %s31
        %p294 = scmp.lt.s32.totalorder %s30, 1
        %s295 = scalar_select %p294, %s30, 1
        %p296 = scmp.lt.s32.totalorder %s293, 1
        %s297 = scalar_select %p296, %s293, 1
        %s298 = smul.addr %s295, 4
        %s299 = sadd.s32 %s297, %s298
        %s300 = smul.addr %s299, 4
        %s301 = scalar_lea.vmem %s2, %s300
        %s302 = smul.u32 2, %s31
        %p303 = scmp.lt.s32.totalorder %s30, 1
        %s304 = scalar_select %p303, %s30, 1
        %s305 = smul.addr %s304, 2
        %s306 = smul.addr %s305, 8
        %s307 = scalar_lea.vmem %s3, %s306
        %s309 = sld [smem:[#allocation4 + %s32]]
        %p311 = scmp.ne.f32.partialorder %s309, %s309
        %s312 = sshrl.u32 %s309, 16
        %s313 = sand.u32 %s312, 1
        %s314 = sadd.s32 32767, %s313
        %s315 = sadd.s32 %s309, %s314
        %s316 = sand.u32 %s315, 4294901760
        %s317 = scalar_select %p311, 2143289344, %s316
        %s319 = sshrl.u32 %s317, 16
        %v320 = vld [vmem:[%s291] sm:$0xf]
        %v321 = vld [vmem:[%s291 + $0x4] sm:$0xf]
        %v322 = vld [vmem:[%s291 + $0x8] sm:$0xf]
        %v323 = vld [vmem:[%s291 + $0xc] sm:$0xf]
        %v324 = vld [vmem:[%s291 + $0x10] sm:$0xf]
        %v325 = vld [vmem:[%s291 + $0x14] sm:$0xf]
        %v326 = vld [vmem:[%s291 + $0x18] sm:$0xf]
        %v327 = vld [vmem:[%s291 + $0x1c] sm:$0xf]
        %v328 = vld [vmem:[%s291 + $0x20] sm:$0xf]
        %v329 = vld [vmem:[%s291 + $0x24] sm:$0xf]
        %v330 = vld [vmem:[%s291 + $0x28] sm:$0xf]
        %v331 = vld [vmem:[%s291 + $0x2c] sm:$0xf]
        %v332 = vld [vmem:[%s291 + $0x30] sm:$0xf]
        %v333 = vld [vmem:[%s291 + $0x34] sm:$0xf]
        %v334 = vld [vmem:[%s291 + $0x38] sm:$0xf]
        %v335 = vld [vmem:[%s291 + $0x3c] sm:$0xf]
        %v336 = vld [vmem:[%s291 + $0x40] sm:$0xf]
        %v337 = vld [vmem:[%s291 + $0x44] sm:$0xf]
        %v338 = vld [vmem:[%s291 + $0x48] sm:$0xf]
        %v339 = vld [vmem:[%s291 + $0x4c] sm:$0xf]
        %v340 = vld [vmem:[%s291 + $0x50] sm:$0xf]
        %v341 = vld [vmem:[%s291 + $0x54] sm:$0xf]
        %v342 = vld [vmem:[%s291 + $0x58] sm:$0xf]
        %v343 = vld [vmem:[%s291 + $0x5c] sm:$0xf]
        %v344 = vld [vmem:[%s291 + $0x60] sm:$0xf]
        %v345 = vld [vmem:[%s291 + $0x64] sm:$0xf]
        %v346 = vld [vmem:[%s291 + $0x68] sm:$0xf]
        %v347 = vld [vmem:[%s291 + $0x6c] sm:$0xf]
        %v348 = vld [vmem:[%s291 + $0x70] sm:$0xf]
        %v349 = vld [vmem:[%s291 + $0x74] sm:$0xf]
        %v350 = vld [vmem:[%s291 + $0x78] sm:$0xf]
        %v351 = vld [vmem:[%s291 + $0x7c] sm:$0xf]
        %s352 = sshll.u32 %s319, 16
        %s353 = sor.u32 %s319, %s352
        %v354 = vstv %s353
        %v356 = vmul.bf16 %v354, %v320
        %v357 = vmul.bf16 %v354, %v321
        %v358 = vmul.bf16 %v354, %v322
        %v359 = vmul.bf16 %v354, %v323
        %v360 = vmul.bf16 %v354, %v324
        %v361 = vmul.bf16 %v354, %v325
        %v362 = vmul.bf16 %v354, %v326
        %v363 = vmul.bf16 %v354, %v327
        %v364 = vmul.bf16 %v354, %v328
        %v365 = vmul.bf16 %v354, %v329
        %v366 = vmul.bf16 %v354, %v330
        %v367 = vmul.bf16 %v354, %v331
        %v368 = vmul.bf16 %v354, %v332
        %v369 = vmul.bf16 %v354, %v333
        %v370 = vmul.bf16 %v354, %v334
        %v371 = vmul.bf16 %v354, %v335
        %v372 = vmul.bf16 %v354, %v336
        %v373 = vmul.bf16 %v354, %v337
        %v374 = vmul.bf16 %v354, %v338
        %v375 = vmul.bf16 %v354, %v339
        %v376 = vmul.bf16 %v354, %v340
        %v377 = vmul.bf16 %v354, %v341
        %v378 = vmul.bf16 %v354, %v342
        %v379 = vmul.bf16 %v354, %v343
        %v380 = vmul.bf16 %v354, %v344
        %v381 = vmul.bf16 %v354, %v345
        %v382 = vmul.bf16 %v354, %v346
        %v383 = vmul.bf16 %v354, %v347
        %v384 = vmul.bf16 %v354, %v348
        %v385 = vmul.bf16 %v354, %v349
        %v386 = vmul.bf16 %v354, %v350
        %v387 = vmul.bf16 %v354, %v351
        %p388 = scmp.eq.s32.totalorder %s32, 0
        // Predicated region
        $region37: #{tpu_custom_call.1} parent=35 // pred_check
          %p389 = pneg %p388
        $region38: #{tpu_custom_call.1} parent=35 // pred_check_branch
          %391 = sbr.rel (%p389) target = $region40
        $region39: #{tpu_custom_call.1} parent=35 // pred_region
          %v424 = vunpack.c.l.b16 %v356
          %v425 = vunpack.c.l.b16 %v357
          %v426 = vunpack.c.l.b16 %v358
          %v427 = vunpack.c.l.b16 %v359
          %v428 = vunpack.c.l.b16 %v360
          %v429 = vunpack.c.l.b16 %v361
          %v430 = vunpack.c.l.b16 %v362
          %v431 = vunpack.c.l.b16 %v363
          %v432 = vunpack.c.l.b16 %v364
          %v433 = vunpack.c.l.b16 %v365
          %v434 = vunpack.c.l.b16 %v366
          %v435 = vunpack.c.l.b16 %v367
          %v436 = vunpack.c.l.b16 %v368
          %v437 = vunpack.c.l.b16 %v369
          %v438 = vunpack.c.l.b16 %v370
          %v439 = vunpack.c.l.b16 %v371
          %v440 = vunpack.c.l.b16 %v372
          %v441 = vunpack.c.l.b16 %v373
          %v442 = vunpack.c.l.b16 %v374
          %v443 = vunpack.c.l.b16 %v375
          %v444 = vunpack.c.l.b16 %v376
          %v445 = vunpack.c.l.b16 %v377
          %v446 = vunpack.c.l.b16 %v378
          %v447 = vunpack.c.l.b16 %v379
          %v448 = vunpack.c.l.b16 %v380
          %v449 = vunpack.c.l.b16 %v381
          %v450 = vunpack.c.l.b16 %v382
          %v451 = vunpack.c.l.b16 %v383
          %v452 = vunpack.c.l.b16 %v384
          %v453 = vunpack.c.l.b16 %v385
          %v454 = vunpack.c.l.b16 %v386
          %v455 = vunpack.c.l.b16 %v387
          %v456 = vpack.c.b16 %v425, %v424
          %v457 = vpack.c.b16 %v427, %v426
          %v458 = vpack.c.b16 %v429, %v428
          %v459 = vpack.c.b16 %v431, %v430
          %v460 = vpack.c.b16 %v433, %v432
          %v461 = vpack.c.b16 %v435, %v434
          %v462 = vpack.c.b16 %v437, %v436
          %v463 = vpack.c.b16 %v439, %v438
          %v464 = vpack.c.b16 %v441, %v440
          %v465 = vpack.c.b16 %v443, %v442
          %v466 = vpack.c.b16 %v445, %v444
          %v467 = vpack.c.b16 %v447, %v446
          %v468 = vpack.c.b16 %v449, %v448
          %v469 = vpack.c.b16 %v451, %v450
          %v470 = vpack.c.b16 %v453, %v452
          %v471 = vpack.c.b16 %v455, %v454
          %vm488 = vcmask 261120
          %489 = vst.msk [vmem:[#allocation2] sm:$0xff] %vm488, %v456
          %490 = vst.msk [vmem:[#allocation2 + $0x8] sm:$0xff] %vm488, %v457
          %491 = vst.msk [vmem:[#allocation2 + $0x10] sm:$0xff] %vm488, %v458
          %492 = vst.msk [vmem:[#allocation2 + $0x18] sm:$0xff] %vm488, %v459
          %493 = vst.msk [vmem:[#allocation2 + $0x20] sm:$0xff] %vm488, %v460
          %494 = vst.msk [vmem:[#allocation2 + $0x28] sm:$0xff] %vm488, %v461
          %495 = vst.msk [vmem:[#allocation2 + $0x30] sm:$0xff] %vm488, %v462
          %496 = vst.msk [vmem:[#allocation2 + $0x38] sm:$0xff] %vm488, %v463
          %497 = vst.msk [vmem:[#allocation2 + $0x40] sm:$0xff] %vm488, %v464
          %498 = vst.msk [vmem:[#allocation2 + $0x48] sm:$0xff] %vm488, %v465
          %499 = vst.msk [vmem:[#allocation2 + $0x50] sm:$0xff] %vm488, %v466
          %500 = vst.msk [vmem:[#allocation2 + $0x58] sm:$0xff] %vm488, %v467
          %501 = vst.msk [vmem:[#allocation2 + $0x60] sm:$0xff] %vm488, %v468
          %502 = vst.msk [vmem:[#allocation2 + $0x68] sm:$0xff] %vm488, %v469
          %503 = vst.msk [vmem:[#allocation2 + $0x70] sm:$0xff] %vm488, %v470
          %504 = vst.msk [vmem:[#allocation2 + $0x78] sm:$0xff] %vm488, %v471
        $region40: #{tpu_custom_call.1} parent=35 // pred_fallthru
          _
        %p505 = scmp.gt.s32.totalorder %s32, 0
        // Predicated region
        $region41: #{tpu_custom_call.1} parent=35 // pred_check
          %p506 = pneg %p505
        $region42: #{tpu_custom_call.1} parent=35 // pred_check_branch
          %508 = sbr.rel (%p506) target = $region44
        $region43: #{tpu_custom_call.1} parent=35 // pred_region
          %v509 = vld [vmem:[#allocation2] sm:$0xff]
          %v510 = vld [vmem:[#allocation2 + $0x8] sm:$0xff]
          %v511 = vld [vmem:[#allocation2 + $0x10] sm:$0xff]
          %v512 = vld [vmem:[#allocation2 + $0x18] sm:$0xff]
          %v513 = vld [vmem:[#allocation2 + $0x20] sm:$0xff]
          %v514 = vld [vmem:[#allocation2 + $0x28] sm:$0xff]
          %v515 = vld [vmem:[#allocation2 + $0x30] sm:$0xff]
          %v516 = vld [vmem:[#allocation2 + $0x38] sm:$0xff]
          %v517 = vld [vmem:[#allocation2 + $0x40] sm:$0xff]
          %v518 = vld [vmem:[#allocation2 + $0x48] sm:$0xff]
          %v519 = vld [vmem:[#allocation2 + $0x50] sm:$0xff]
          %v520 = vld [vmem:[#allocation2 + $0x58] sm:$0xff]
          %v521 = vld [vmem:[#allocation2 + $0x60] sm:$0xff]
          %v522 = vld [vmem:[#allocation2 + $0x68] sm:$0xff]
          %v523 = vld [vmem:[#allocation2 + $0x70] sm:$0xff]
          %v524 = vld [vmem:[#allocation2 + $0x78] sm:$0xff]
          %v557 = vunpack.c.l.b16 %v356
          %v558 = vunpack.c.l.b16 %v357
          %v559 = vunpack.c.l.b16 %v358
          %v560 = vunpack.c.l.b16 %v359
          %v561 = vunpack.c.l.b16 %v360
          %v562 = vunpack.c.l.b16 %v361
          %v563 = vunpack.c.l.b16 %v362
          %v564 = vunpack.c.l.b16 %v363
          %v565 = vunpack.c.l.b16 %v364
          %v566 = vunpack.c.l.b16 %v365
          %v567 = vunpack.c.l.b16 %v366
          %v568 = vunpack.c.l.b16 %v367
          %v569 = vunpack.c.l.b16 %v368
          %v570 = vunpack.c.l.b16 %v369
          %v571 = vunpack.c.l.b16 %v370
          %v572 = vunpack.c.l.b16 %v371
          %v573 = vunpack.c.l.b16 %v372
          %v574 = vunpack.c.l.b16 %v373
          %v575 = vunpack.c.l.b16 %v374
          %v576 = vunpack.c.l.b16 %v375
          %v577 = vunpack.c.l.b16 %v376
          %v578 = vunpack.c.l.b16 %v377
          %v579 = vunpack.c.l.b16 %v378
          %v580 = vunpack.c.l.b16 %v379
          %v581 = vunpack.c.l.b16 %v380
          %v582 = vunpack.c.l.b16 %v381
          %v583 = vunpack.c.l.b16 %v382
          %v584 = vunpack.c.l.b16 %v383
          %v585 = vunpack.c.l.b16 %v384
          %v586 = vunpack.c.l.b16 %v385
          %v587 = vunpack.c.l.b16 %v386
          %v588 = vunpack.c.l.b16 %v387
          %v589 = vpack.c.b16 %v558, %v557
          %v590 = vpack.c.b16 %v560, %v559
          %v591 = vpack.c.b16 %v562, %v561
          %v592 = vpack.c.b16 %v564, %v563
          %v593 = vpack.c.b16 %v566, %v565
          %v594 = vpack.c.b16 %v568, %v567
          %v595 = vpack.c.b16 %v570, %v569
          %v596 = vpack.c.b16 %v572, %v571
          %v597 = vpack.c.b16 %v574, %v573
          %v598 = vpack.c.b16 %v576, %v575
          %v599 = vpack.c.b16 %v578, %v577
          %v600 = vpack.c.b16 %v580, %v579
          %v601 = vpack.c.b16 %v582, %v581
          %v602 = vpack.c.b16 %v584, %v583
          %v603 = vpack.c.b16 %v586, %v585
          %v604 = vpack.c.b16 %v588, %v587
          %v621 = vadd.bf16 %v509, %v589
          %v622 = vadd.bf16 %v510, %v590
          %v623 = vadd.bf16 %v511, %v591
          %v624 = vadd.bf16 %v512, %v592
          %v625 = vadd.bf16 %v513, %v593
          %v626 = vadd.bf16 %v514, %v594
          %v627 = vadd.bf16 %v515, %v595
          %v628 = vadd.bf16 %v516, %v596
          %v629 = vadd.bf16 %v517, %v597
          %v630 = vadd.bf16 %v518, %v598
          %v631 = vadd.bf16 %v519, %v599
          %v632 = vadd.bf16 %v520, %v600
          %v633 = vadd.bf16 %v521, %v601
          %v634 = vadd.bf16 %v522, %v602
          %v635 = vadd.bf16 %v523, %v603
          %v636 = vadd.bf16 %v524, %v604
          %vm637 = vcmask 261120
          %638 = vst.msk [vmem:[#allocation2] sm:$0xff] %vm637, %v621
          %639 = vst.msk [vmem:[#allocation2 + $0x8] sm:$0xff] %vm637, %v622
          %640 = vst.msk [vmem:[#allocation2 + $0x10] sm:$0xff] %vm637, %v623
          %641 = vst.msk [vmem:[#allocation2 + $0x18] sm:$0xff] %vm637, %v624
          %642 = vst.msk [vmem:[#allocation2 + $0x20] sm:$0xff] %vm637, %v625
          %643 = vst.msk [vmem:[#allocation2 + $0x28] sm:$0xff] %vm637, %v626
          %644 = vst.msk [vmem:[#allocation2 + $0x30] sm:$0xff] %vm637, %v627
          %645 = vst.msk [vmem:[#allocation2 + $0x38] sm:$0xff] %vm637, %v628
          %646 = vst.msk [vmem:[#allocation2 + $0x40] sm:$0xff] %vm637, %v629
          %647 = vst.msk [vmem:[#allocation2 + $0x48] sm:$0xff] %vm637, %v630
          %648 = vst.msk [vmem:[#allocation2 + $0x50] sm:$0xff] %vm637, %v631
          %649 = vst.msk [vmem:[#allocation2 + $0x58] sm:$0xff] %vm637, %v632
          %650 = vst.msk [vmem:[#allocation2 + $0x60] sm:$0xff] %vm637, %v633
          %651 = vst.msk [vmem:[#allocation2 + $0x68] sm:$0xff] %vm637, %v634
          %652 = vst.msk [vmem:[#allocation2 + $0x70] sm:$0xff] %vm637, %v635
          %653 = vst.msk [vmem:[#allocation2 + $0x78] sm:$0xff] %vm637, %v636
        $region44: #{tpu_custom_call.1} parent=35 // pred_fallthru
          _
        %p654 = scmp.eq.s32.totalorder %s32, 3
        // Predicated region
        $region45: #{tpu_custom_call.1} parent=35 // pred_check
          %p655 = pneg %p654
        $region46: #{tpu_custom_call.1} parent=35 // pred_check_branch
          %657 = sbr.rel (%p655) target = $region48
        $region47: #{tpu_custom_call.1} parent=35 // pred_region
          %v658 = vld [vmem:[%s301] sm:$0xff]
          %v659 = vld [vmem:[%s301 + $0x8] sm:$0xff]
          %v660 = vld [vmem:[#allocation2] sm:$0xff]
          %v661 = vld [vmem:[#allocation2 + $0x8] sm:$0xff]
          %v662 = vld [vmem:[#allocation2 + $0x10] sm:$0xff]
          %v663 = vld [vmem:[#allocation2 + $0x18] sm:$0xff]
          %v664 = vld [vmem:[#allocation2 + $0x20] sm:$0xff]
          %v665 = vld [vmem:[#allocation2 + $0x28] sm:$0xff]
          %v666 = vld [vmem:[#allocation2 + $0x30] sm:$0xff]
          %v667 = vld [vmem:[#allocation2 + $0x38] sm:$0xff]
          %v668 = vld [vmem:[#allocation2 + $0x40] sm:$0xff]
          %v669 = vld [vmem:[#allocation2 + $0x48] sm:$0xff]
          %v670 = vld [vmem:[#allocation2 + $0x50] sm:$0xff]
          %v671 = vld [vmem:[#allocation2 + $0x58] sm:$0xff]
          %v672 = vld [vmem:[#allocation2 + $0x60] sm:$0xff]
          %v673 = vld [vmem:[#allocation2 + $0x68] sm:$0xff]
          %v674 = vld [vmem:[#allocation2 + $0x70] sm:$0xff]
          %v675 = vld [vmem:[#allocation2 + $0x78] sm:$0xff]
          %v678 = vunpack.c.l.b16 %v658
          %v679 = vunpack.c.h.b16 %v658
          %v680 = vunpack.c.l.b16 %v659
          %v681 = vunpack.c.h.b16 %v659
          %v682 = vpack.c.b16 %v680, %v678
          %v683 = vpack.c.b16 %v681, %v679
          %686 = vmatprep.subr.bf16.mxu0 0
          %687 = vmatpush1.bf16.msra.mxu0 %v660
          %688 = vmatprep.subr.bf16.mxu0 0
          %689 = vmatpush1.bf16.msra.mxu0 %v661
          %690 = vmatprep.subr.bf16.mxu0 0
          %691 = vmatpush1.bf16.msra.mxu0 %v662
          %692 = vmatprep.subr.bf16.mxu0 0
          %693 = vmatpush1.bf16.msra.mxu0 %v663
          %694 = vmatprep.subr.bf16.mxu0 0
          %695 = vmatpush1.bf16.msra.mxu0 %v664
          %696 = vmatprep.subr.bf16.mxu0 0
          %697 = vmatpush1.bf16.msra.mxu0 %v665
          %698 = vmatprep.subr.bf16.mxu0 0
          %699 = vmatpush1.bf16.msra.mxu0 %v666
          %700 = vmatprep.subr.bf16.mxu0 0
          %701 = vmatpush1.bf16.msra.mxu0 %v667
          %702 = vmatprep.subr.bf16.mxu0 0
          %703 = vmatpush1.bf16.msra.mxu0 %v668
          %704 = vmatprep.subr.bf16.mxu0 0
          %705 = vmatpush1.bf16.msra.mxu0 %v669
          %706 = vmatprep.subr.bf16.mxu0 0
          %707 = vmatpush1.bf16.msra.mxu0 %v670
          %708 = vmatprep.subr.bf16.mxu0 0
          %709 = vmatpush1.bf16.msra.mxu0 %v671
          %710 = vmatprep.subr.bf16.mxu0 0
          %711 = vmatpush1.bf16.msra.mxu0 %v672
          %712 = vmatprep.subr.bf16.mxu0 0
          %713 = vmatpush1.bf16.msra.mxu0 %v673
          %714 = vmatprep.subr.bf16.mxu0 0
          %715 = vmatpush1.bf16.msra.mxu0 %v674
          %716 = vmatprep.subr.bf16.mxu0 0
          %717 = vmatpush1.bf16.msra.mxu0 %v675
          %718 = vmatprep.mubr.bf16.mxu0 %v683
          %719 = vmatmul.mubr.bf16.gmra.mrb[0].mxu0 %v682
          %v720 = vpop.f32.mrb[0].mxu0
          %v721 = vadd.f32 0.0, %v720
          %v722 = vpop.f32.mrb[0].mxu0
          %v723 = vpop.f32.mrb[0].mxu0
          %v724 = vadd.f32 0.0, %v723
          %v725 = vpop.f32.mrb[0].mxu0
          %726 = vdwg.mxu0
          %v727 = vld [vmem:[%s307] sm:$0xff]
          %v728 = vld [vmem:[%s307 + $0x8] sm:$0xff]
          %730 = vset.pattern.permute.xlu0 0
          %731 = vperm.xlu0 %730, %v727
          %v732 = vpop.permute.xlu0 %731
          %735 = vset.pattern.permute.xlu0 0
          %736 = vperm.xlu0 %735, %v728
          %v737 = vpop.permute.xlu0 %736
          %v739 = vmul.f32 %v721, %v732
          %v740 = vmul.f32 %v724, %v737
          %v741 = vpack.c.bf16 %v740, %v739
          %v742 = vld [vmem:[%s4] sm:$0xf]
          %v743 = vld [vmem:[%s4 + $0x4] sm:$0xf]
          %v744 = vld [vmem:[%s4 + $0x8] sm:$0xf]
          %v745 = vld [vmem:[%s4 + $0xc] sm:$0xf]
          %v750 = vunpack.c.l.b16 %v742
          %v751 = vunpack.c.l.b16 %v743
          %v752 = vunpack.c.l.b16 %v744
          %v753 = vunpack.c.l.b16 %v745
          %v754 = vpack.c.b16 %v751, %v750
          %v755 = vpack.c.b16 %v753, %v752
          %vm758 = vcmask 261120
          %v760 = vsel %vm758, %v741, 0
          %762 = vmatprep.subr.bf16.mxu0 0
          %763 = vmatpush1.bf16.msra.mxu0 %v754
          %764 = vmatprep.subr.bf16.mxu0 0
          %765 = vmatpush1.bf16.msra.mxu0 %v755
          %766 = vmatprep.subr.bf16.mxu0 0
          %767 = vmatpush1.bf16.msra.mxu0 0
          %768 = vmatprep.subr.bf16.mxu0 0
          %769 = vmatpush1.bf16.msra.mxu0 0
          %770 = vmatprep.subr.bf16.mxu0 0
          %771 = vmatpush1.bf16.msra.mxu0 0
          %772 = vmatprep.subr.bf16.mxu0 0
          %773 = vmatpush1.bf16.msra.mxu0 0
          %774 = vmatprep.subr.bf16.mxu0 0
          %775 = vmatpush1.bf16.msra.mxu0 0
          %776 = vmatprep.subr.bf16.mxu0 0
          %777 = vmatpush1.bf16.msra.mxu0 0
          %778 = vmatprep.subr.bf16.mxu0 0
          %779 = vmatpush1.bf16.msra.mxu0 0
          %780 = vmatprep.subr.bf16.mxu0 0
          %781 = vmatpush1.bf16.msra.mxu0 0
          %782 = vmatprep.subr.bf16.mxu0 0
          %783 = vmatpush1.bf16.msra.mxu0 0
          %784 = vmatprep.subr.bf16.mxu0 0
          %785 = vmatpush1.bf16.msra.mxu0 0
          %786 = vmatprep.subr.bf16.mxu0 0
          %787 = vmatpush1.bf16.msra.mxu0 0
          %788 = vmatprep.subr.bf16.mxu0 0
          %789 = vmatpush1.bf16.msra.mxu0 0
          %790 = vmatprep.subr.bf16.mxu0 0
          %791 = vmatpush1.bf16.msra.mxu0 0
          %792 = vmatprep.subr.bf16.mxu0 0
          %793 = vmatpush1.bf16.msra.mxu0 0
          %794 = vmatprep.mubr.bf16.mxu0 0
          %795 = vmatmul.mubr.bf16.gmra.mrb[0].mxu0 %v760
          %v796 = vpop.f32.mrb[0].mxu0
          %v797 = vadd.f32 0.0, %v796
          %v798 = vpop.f32.mrb[0].mxu0
          %v799 = vpop.f32.mrb[0].mxu0
          %v800 = vadd.f32 0.0, %v799
          %v801 = vpop.f32.mrb[0].mxu0
          %802 = vdwg.mxu0
          %803 = vst [vmem:[%s278] sm:$0xff] %v797
          %804 = vst [vmem:[%s278 + $0x8] sm:$0xff] %v800
        $region48: #{tpu_custom_call.1} parent=35 // pred_fallthru
          _
        %s805 = sand.u32 %s157, 1
        %s806 = scalar_lea.sflag [#allocation6], %s805
        %s807 = sand.u32 %s157, 1
        %s808 = smul.addr %s807, 16
        %s809 = scalar_lea.vmem [#allocation5], %s808
        // Predicated region
        $region49: #{tpu_custom_call.1} parent=35 // pred_check
          %p810 = pneg %p167
        $region50: #{tpu_custom_call.1} parent=35 // pred_check_branch
          %812 = sbr.rel (%p810) target = $region52
        $region51: #{tpu_custom_call.1} parent=35 // pred_region
          %s814 = ssub.s32 256, 256
          %815 = vsyncadd %s806, %s814
          %s816 = smul.addr %s30, 2
          %s817 = smul.addr %s816, 128
          %s818 = scalar_lea.hbm %s5, %s817
          %s819 = sshll.u32 %s809, 4
          %s820 = int_to_ptr.vmem [resolvable:$true] %s819
          %825 = dma.vmem_to_hbm [thread:$0]  %s820, 256, %s818, %s806, 128, 128, 8
        $region52: #{tpu_custom_call.1} parent=35 // pred_fallthru
          _
      $region36: #{tpu_custom_call.1} parent=5 // pred_fallthru
        _
      %p826 = scmp.le.s32.totalorder 2, %s20
      // Predicated region
      $region53: #{tpu_custom_call.1} parent=5 // pred_check
        %p827 = pneg %p826
      $region54: #{tpu_custom_call.1} parent=5 // pred_check_branch
        %829 = sbr.rel (%p827) target = $region56
      $region55: #{tpu_custom_call.1} parent=5 // pred_region
        %s830 = ssub.s32 %s20, 2
        // Predicated region
        $region57: #{tpu_custom_call.1} parent=55 // pred_check
          %p831 = pneg %p173
        $region58: #{tpu_custom_call.1} parent=55 // pred_check_branch
          %833 = sbr.rel (%p831) target = $region60
        $region59: #{tpu_custom_call.1} parent=55 // pred_region
          %s834 = sand.u32 %s158, 1
          %s835 = scalar_lea.sflag [#allocation6], %s834
          %s836 = sand.u32 %s158, 1
          %s837 = smul.addr %s836, 16
          %s838 = scalar_lea.vmem [#allocation5], %s837
          %839 = dma.done %s835, 256
        $region60: #{tpu_custom_call.1} parent=55 // pred_fallthru
          _
      $region56: #{tpu_custom_call.1} parent=5 // pred_fallthru
        _
    $region6: #{tpu_custom_call.1} parent=1 // loop_footer
      %s24 = sadd.s32 1, %s20
    $region7: #{tpu_custom_call.1} parent=1 // loop_footer_branch
      %19 = sbr.rel target = $region3
    $region8: #{tpu_custom_call.1} parent=1 // loop_exit
      _
    %840 = vsyncpa [#allocation6], 1
    %s841 = scalar_lea.sflag [#allocation6], 1
    %842 = vsyncpa %s841, 1

// kernel: tpu_custom_call.1
$region0: #{tpu_custom_call.1}
  #allocation0 [shape = 'u32[]', space=smem, size = 0x4, offset = 0x4, fixed_abs, tag = 'smem constant byte address 0x4 - core index']
  #allocation1 [shape = 'u32[144,128]{1,0:T(1,128)}', space=vmem, size = 0x12000, scoped, tag = 'internal scratch']
  #allocation2 [shape = 'bf16[1,256,32]{2,1,0:T(16,128)(2,1)}', space=vmem, size = 0x10000, scoped, tag = 'scratch operand']
  #allocation3 [shape = 's32[1]{0}', space=sflag, size = 0x4, scoped, tag = 'scoped memory for tpu_custom_call.1']
  #allocation4 [shape = 'u8[512]{0}', space=smem, size = 0x200, scoped, tag = 'prefetched SMEM operand 0']
  %s0 = inlined_call_operand.vmem [shape: f32[4], index: 0, kind: input, shape index: {}]
  %s1 = inlined_call_operand.vmem [shape: bf16[2,4,256,32], index: 1, kind: input, shape index: {}]
  %s2 = inlined_call_operand.vmem [shape: bf16[2,16,256], index: 2, kind: input, shape index: {}]
  %s3 = inlined_call_operand.vmem [shape: f32[2,16,1], index: 3, kind: input, shape index: {}]
  %s4 = inlined_call_operand.vmem [shape: bf16[32,128], index: 4, kind: input, shape index: {}]
  %s5 = inlined_call_operand.hbm [shape: f32[2,16,128], index: 5, kind: output, shape index: {}]
  %s6 = sld [smem:[#allocation0]]
  $region61: #{tpu_custom_call.1} parent=0
    _
  %s8 = ssub.s32 1, %s6
  %s9 = scalar_select 0, %s8, %s6
  %s10 = sshll.u32 %s0, 4
  %s11 = int_to_ptr.vmem [resolvable:$true] %s10
  %13 = dma.vmem_to_smem %s11, 16, [#allocation4], [#allocation3]
  %14 = dma.done [#allocation3], 16
  %15 = sfence
  $region1: #{tpu_custom_call.1} parent=0
    #allocation5 [shape = 'u8[16384]{0}', space=vmem, size = 0x4000, scoped, tag = 'output window, operand 0']
    #allocation6 [shape = 's32[2]{0}', space=sflag, size = 0x8, scoped, tag = 'scoped memory for tpu_custom_call.1']
    %16 = vsyncpa [#allocation6], 0
    %s17 = scalar_lea.sflag [#allocation6], 1
    %18 = vsyncpa %s17, 0
    loop: start=0, step=1, limit=10
    $region2: #{tpu_custom_call.1} parent=1 // loop_pre_header
      _
    $region3: #{tpu_custom_call.1} parent=1 // loop_header
      %s20 = sphi 0, %s24
      %p21 = scmp.ge.s32.totalorder %s20, 10
      %s27 = sphi 0, %s46
      %s28 = sphi 0, %s42
      %s29 = sphi 0, %s38
      %s30 = sphi 0, %s27
      %s31 = sphi 0, %s28
      %s32 = sphi 0, %s29
      %s33 = sphi 0, %s30
      %s34 = sphi 0, %s31
      %s35 = sphi 0, %s32
      %s53 = sphi 0, %s55
      %s56 = sphi 0, %s53
      %s57 = sphi 0, %s56
      %s73 = sphi 0, %s57
      %s81 = sphi 0, %s83
      %s84 = sphi 0, %s81
      %s85 = sphi 0, %s84
      %s101 = sphi 0, %s85
      %s107 = sphi 0, %s109
      %s110 = sphi 0, %s107
      %s111 = sphi 0, %s110
      %s127 = sphi 0, %s111
      %s131 = sphi 0, %s131
      %s133 = sphi 0, %s131
      %s134 = sphi 0, %s133
      %s148 = sphi 0, %s134
      %s154 = sphi 0, %s156
      %s157 = sphi 0, %s154
      %s158 = sphi 0, %s157
      %s174 = sphi 0, %s158
    $region4: #{tpu_custom_call.1} parent=1 // loop_header_branch
      %23 = sbr.rel (%p21) target = $region8
    $region5: #{tpu_custom_call.1} parent=1 // loop_body
      %s25 = ssub.s32 %s20, 1
      %s26 = ssub.s32 %s20, 2
      %s36 = sadd.s32 1, %s29
      %p37 = scmp.ge.s32.totalorder %s36, 4
      %s38 = scalar_select %p37, 0, %s36
      %s39 = sadd.s32 1, %s28
      %s40 = scalar_select %p37, %s39, %s28
      %p41 = scmp.ge.s32.totalorder %s40, 1
      %s42 = scalar_select %p41, 0, %s40
      %s43 = sadd.s32 1, %s27
      %s44 = scalar_select %p41, %s43, %s27
      %p45 = scmp.ge.s32.totalorder %s44, 2
      %s46 = scalar_select %p45, 0, %s44
      %s47 = ssub.s32 %s27, %s46
      %s48 = ssub.s32 %s29, %s38
      %s49 = sor.u32 %s47, %s48
      %s50 = ssub.s32 %s28, %s42
      %s51 = sor.u32 %s49, %s50
      %p52 = scmp.eq.s32.totalorder %s51, 0
      %s54 = sadd.s32 %s53, 1
      %s55 = scalar_select %p52, %s53, %s54
      %p58 = pneg %p52
      %p59 = scmp.eq.s32.totalorder %s20, 7
      %p60 = por %p58, %p59
      %p61 = scmp.ne.s32.totalorder %s53, %s56
      %p62 = scmp.eq.s32.totalorder %s20, 0
      %p63 = por %p61, %p62
      %p64 = scmp.ne.s32.totalorder %s53, %s56
      %p65 = scmp.eq.s32.totalorder %s25, 7
      %p66 = por %p64, %p65
      %p67 = scmp.ne.s32.totalorder %s56, %s57
      %p68 = scmp.eq.s32.totalorder %s25, 0
      %p69 = por %p67, %p68
      %p70 = scmp.ne.s32.totalorder %s56, %s57
      %p71 = scmp.eq.s32.totalorder %s26, 7
      %p72 = por %p70, %p71
      %p74 = scmp.ne.s32.totalorder %s57, %s73
      %p75 = scmp.eq.s32.totalorder %s26, 0
      %p76 = por %p74, %p75
      %s77 = ssub.s32 %s27, %s46
      %s78 = ssub.s32 %s28, %s42
      %s79 = sor.u32 %s77, %s78
      %p80 = scmp.eq.s32.totalorder %s79, 0
      %s82 = sadd.s32 %s81, 1
      %s83 = scalar_select %p80, %s81, %s82
      %p86 = pneg %p80
      %p87 = scmp.eq.s32.totalorder %s20, 7
      %p88 = por %p86, %p87
      %p89 = scmp.ne.s32.totalorder %s81, %s84
      %p90 = scmp.eq.s32.totalorder %s20, 0
      %p91 = por %p89, %p90
      %p92 = scmp.ne.s32.totalorder %s81, %s84
      %p93 = scmp.eq.s32.totalorder %s25, 7
      %p94 = por %p92, %p93
      %p95 = scmp.ne.s32.totalorder %s84, %s85
      %p96 = scmp.eq.s32.totalorder %s25, 0
      %p97 = por %p95, %p96
      %p98 = scmp.ne.s32.totalorder %s84, %s85
      %p99 = scmp.eq.s32.totalorder %s26, 7
      %p100 = por %p98, %p99
      %p102 = scmp.ne.s32.totalorder %s85, %s101
      %p103 = scmp.eq.s32.totalorder %s26, 0
      %p104 = por %p102, %p103
      %s105 = ssub.s32 %s27, %s46
      %p106 = scmp.eq.s32.totalorder %s105, 0
      %s108 = sadd.s32 %s107, 1
      %s109 = scalar_select %p106, %s107, %s108
      %p112 = pneg %p106
      %p113 = scmp.eq.s32.totalorder %s20, 7
      %p114 = por %p112, %p113
      %p115 = scmp.ne.s32.totalorder %s107, %s110
      %p116 = scmp.eq.s32.totalorder %s20, 0
      %p117 = por %p115, %p116
      %p118 = scmp.ne.s32.totalorder %s107, %s110
      %p119 = scmp.eq.s32.totalorder %s25, 7
      %p120 = por %p118, %p119
      %p121 = scmp.ne.s32.totalorder %s110, %s111
      %p122 = scmp.eq.s32.totalorder %s25, 0
      %p123 = por %p121, %p122
      %p124 = scmp.ne.s32.totalorder %s110, %s111
      %p125 = scmp.eq.s32.totalorder %s26, 7
      %p126 = por %p124, %p125
      %p128 = scmp.ne.s32.totalorder %s111, %s127
      %p129 = scmp.eq.s32.totalorder %s26, 0
      %p130 = por %p128, %p129
      %s132 = sadd.s32 %s131, 1
      %p135 = scmp.eq.s32.totalorder %s20, 7
      %p136 = scmp.ne.s32.totalorder %s131, %s133
      %p137 = scmp.eq.s32.totalorder %s20, 0
      %p138 = por %p136, %p137
      %p139 = scmp.ne.s32.totalorder %s131, %s133
      %p140 = scmp.eq.s32.totalorder %s25, 7
      %p141 = por %p139, %p140
      %p142 = scmp.ne.s32.totalorder %s133, %s134
      %p143 = scmp.eq.s32.totalorder %s25, 0
      %p144 = por %p142, %p143
      %p145 = scmp.ne.s32.totalorder %s133, %s134
      %p146 = scmp.eq.s32.totalorder %s26, 7
      %p147 = por %p145, %p146
      %p149 = scmp.ne.s32.totalorder %s134, %s148
      %p150 = scmp.eq.s32.totalorder %s26, 0
      %p151 = por %p149, %p150
      %s152 = ssub.s32 %s27, %s46
      %p153 = scmp.eq.s32.totalorder %s152, 0
      %s155 = sadd.s32 %s154, 1
      %s156 = scalar_select %p153, %s154, %s155
      %p159 = pneg %p153
      %p160 = scmp.eq.s32.totalorder %s20, 7
      %p161 = por %p159, %p160
      %p162 = scmp.ne.s32.totalorder %s154, %s157
      %p163 = scmp.eq.s32.totalorder %s20, 0
      %p164 = por %p162, %p163
      %p165 = scmp.ne.s32.totalorder %s154, %s157
      %p166 = scmp.eq.s32.totalorder %s25, 7
      %p167 = por %p165, %p166
      %p168 = scmp.ne.s32.totalorder %s157, %s158
      %p169 = scmp.eq.s32.totalorder %s25, 0
      %p170 = por %p168, %p169
      %p171 = scmp.ne.s32.totalorder %s157, %s158
      %p172 = scmp.eq.s32.totalorder %s26, 7
      %p173 = por %p171, %p172
      %p175 = scmp.ne.s32.totalorder %s158, %s174
      %p176 = scmp.eq.s32.totalorder %s26, 0
      %p177 = por %p175, %p176
      %p178 = scmp.le.s32.totalorder 1, %s20
      %p179 = scmp.lt.s32.totalorder %s20, 9
      %p180 = pnand %p178, %p179
      %p181 = pneg %p180
      // Predicated region
      $region9: #{tpu_custom_call.1} parent=5 // pred_check
        _
      $region10: #{tpu_custom_call.1} parent=5 // pred_check_branch
        %183 = sbr.rel (%p180) target = $region12
      $region11: #{tpu_custom_call.1} parent=5 // pred_region
        %s184 = ssub.s32 %s20, 1
        // Predicated region
        $region13: #{tpu_custom_call.1} parent=11 // pred_check
          %p185 = pneg %p144
        $region14: #{tpu_custom_call.1} parent=11 // pred_check_branch
          %187 = sbr.rel (%p185) target = $region16
        $region15: #{tpu_custom_call.1} parent=11 // pred_region
          _
        $region16: #{tpu_custom_call.1} parent=11 // pred_fallthru
          _
      $region12: #{tpu_custom_call.1} parent=5 // pred_fallthru
        _
      %p188 = scmp.lt.s32.totalorder %s20, 8
      // Predicated region
      $region17: #{tpu_custom_call.1} parent=5 // pred_check
        %p189 = pneg %p188
      $region18: #{tpu_custom_call.1} parent=5 // pred_check_branch
        %191 = sbr.rel (%p189) target = $region20
      $region19: #{tpu_custom_call.1} parent=5 // pred_region
        // Predicated region
        $region21: #{tpu_custom_call.1} parent=19 // pred_check
          %p192 = pneg %p63
        $region22: #{tpu_custom_call.1} parent=19 // pred_check_branch
          %194 = sbr.rel (%p192) target = $region24
        $region23: #{tpu_custom_call.1} parent=19 // pred_region
          %s195 = smul.u32 32, %s28
          %p196 = scmp.lt.s32.totalorder %s27, 1
          %s197 = scalar_select %p196, %s27, 1
          %p198 = scmp.lt.s32.totalorder %s29, 3
          %s199 = scalar_select %p198, %s29, 3
          %p200 = scmp.lt.s32.totalorder %s195, 31
          %s201 = scalar_select %p200, %s195, 31
          %s202 = smul.addr %s199, 32
          %s203 = sadd.s32 %s201, %s202
          %s204 = smul.addr %s197, 128
          %s205 = sadd.s32 %s203, %s204
          %s206 = smul.addr %s205, 4
          %s207 = scalar_lea.vmem %s1, %s206
          %s208 = smul.u32 32, %s28
        $region24: #{tpu_custom_call.1} parent=19 // pred_fallthru
          _
        // Predicated region
        $region25: #{tpu_custom_call.1} parent=19 // pred_check
          %p209 = pneg %p91
        $region26: #{tpu_custom_call.1} parent=19 // pred_check_branch
          %211 = sbr.rel (%p209) target = $region28
        $region27: #{tpu_custom_call.1} parent=19 // pred_region
          %s212 = smul.u32 2, %s28
          %p213 = scmp.lt.s32.totalorder %s27, 1
          %s214 = scalar_select %p213, %s27, 1
          %p215 = scmp.lt.s32.totalorder %s212, 1
          %s216 = scalar_select %p215, %s212, 1
          %s217 = smul.addr %s214, 4
          %s218 = sadd.s32 %s216, %s217
          %s219 = smul.addr %s218, 4
          %s220 = scalar_lea.vmem %s2, %s219
          %s221 = smul.u32 2, %s28
        $region28: #{tpu_custom_call.1} parent=19 // pred_fallthru
          _
        // Predicated region
        $region29: #{tpu_custom_call.1} parent=19 // pred_check
          %p222 = pneg %p117
        $region30: #{tpu_custom_call.1} parent=19 // pred_check_branch
          %224 = sbr.rel (%p222) target = $region32
        $region31: #{tpu_custom_call.1} parent=19 // pred_region
          %p225 = scmp.lt.s32.totalorder %s27, 1
          %s226 = scalar_select %p225, %s27, 1
          %s227 = smul.addr %s226, 2
          %s228 = smul.addr %s227, 8
          %s229 = scalar_lea.vmem %s3, %s228
        $region32: #{tpu_custom_call.1} parent=19 // pred_fallthru
          _
      $region20: #{tpu_custom_call.1} parent=5 // pred_fallthru
        _
      %p230 = scmp.le.s32.totalorder 1, %s20
      %p231 = scmp.lt.s32.totalorder %s20, 9
      %p232 = pnand %p230, %p231
      %p233 = pneg %p232
      // Predicated region
      $region33: #{tpu_custom_call.1} parent=5 // pred_check
        _
      $region34: #{tpu_custom_call.1} parent=5 // pred_check_branch
        %235 = sbr.rel (%p232) target = $region36
      $region35: #{tpu_custom_call.1} parent=5 // pred_region
        %s236 = ssub.s32 %s20, 1
        %s237 = smul.u32 32, %s31
        %p238 = scmp.lt.s32.totalorder %s30, 1
        %s239 = scalar_select %p238, %s30, 1
        %p240 = scmp.lt.s32.totalorder %s32, 3
        %s241 = scalar_select %p240, %s32, 3
        %p242 = scmp.lt.s32.totalorder %s237, 31
        %s243 = scalar_select %p242, %s237, 31
        %s244 = smul.addr %s241, 32
        %s245 = sadd.s32 %s243, %s244
        %s246 = smul.addr %s239, 128
        %s247 = sadd.s32 %s245, %s246
        %s248 = smul.addr %s247, 4
        %s249 = scalar_lea.vmem %s1, %s248
        %p250 = pneg %p69
        %p251 = pneg %p66
        %s252 = smul.u32 2, %s31
        %p253 = scmp.lt.s32.totalorder %s30, 1
        %s254 = scalar_select %p253, %s30, 1
        %p255 = scmp.lt.s32.totalorder %s252, 1
        %s256 = scalar_select %p255, %s252, 1
        %s257 = smul.addr %s254, 4
        %s258 = sadd.s32 %s256, %s257
        %s259 = smul.addr %s258, 4
        %s260 = scalar_lea.vmem %s2, %s259
        %p261 = pneg %p97
        %p262 = pneg %p94
        %p263 = scmp.lt.s32.totalorder %s30, 1
        %s264 = scalar_select %p263, %s30, 1
        %s265 = smul.addr %s264, 2
        %s266 = smul.addr %s265, 8
        %s267 = scalar_lea.vmem %s3, %s266
        %p268 = pneg %p123
        %p269 = pneg %p120
        %p270 = pneg %p144
        %p271 = pneg %p141
        %p272 = pneg %p170
        %p273 = pneg %p167
        %s274 = sand.u32 %s157, 1
        %s275 = scalar_lea.sflag [#allocation6], %s274
        %s276 = sand.u32 %s157, 1
        %s277 = smul.addr %s276, 16
        %s278 = scalar_lea.vmem [#allocation5], %s277
        %s279 = smul.u32 32, %s31
        %p280 = scmp.lt.s32.totalorder %s30, 1
        %s281 = scalar_select %p280, %s30, 1
        %p282 = scmp.lt.s32.totalorder %s32, 3
        %s283 = scalar_select %p282, %s32, 3
        %p284 = scmp.lt.s32.totalorder %s279, 31
        %s285 = scalar_select %p284, %s279, 31
        %s286 = smul.addr %s283, 32
        %s287 = sadd.s32 %s285, %s286
        %s288 = smul.addr %s281, 128
        %s289 = sadd.s32 %s287, %s288
        %s290 = smul.addr %s289, 4
        %s291 = scalar_lea.vmem %s1, %s290
        %s292 = smul.u32 32, %s31
        %s293 = smul.u32 2, %s31
        %p294 = scmp.lt.s32.totalorder %s30, 1
        %s295 = scalar_select %p294, %s30, 1
        %p296 = scmp.lt.s32.totalorder %s293, 1
        %s297 = scalar_select %p296, %s293, 1
        %s298 = smul.addr %s295, 4
        %s299 = sadd.s32 %s297, %s298
        %s300 = smul.addr %s299, 4
        %s301 = scalar_lea.vmem %s2, %s300
        %s302 = smul.u32 2, %s31
        %p303 = scmp.lt.s32.totalorder %s30, 1
        %s304 = scalar_select %p303, %s30, 1
        %s305 = smul.addr %s304, 2
        %s306 = smul.addr %s305, 8
        %s307 = scalar_lea.vmem %s3, %s306
        %s309 = sld [smem:[#allocation4 + %s32]]
        %p311 = scmp.ne.f32.partialorder %s309, %s309
        %s312 = sshrl.u32 %s309, 16
        %s313 = sand.u32 %s312, 1
        %s314 = sadd.s32 32767, %s313
        %s315 = sadd.s32 %s309, %s314
        %s316 = sand.u32 %s315, 4294901760
        %s317 = scalar_select %p311, 2143289344, %s316
        %s319 = sshrl.u32 %s317, 16
        %v320 = vld [vmem:[%s291] sm:$0xf]
        %v321 = vld [vmem:[%s291 + $0x4] sm:$0xf]
        %v322 = vld [vmem:[%s291 + $0x8] sm:$0xf]
        %v323 = vld [vmem:[%s291 + $0xc] sm:$0xf]
        %v324 = vld [vmem:[%s291 + $0x10] sm:$0xf]
        %v325 = vld [vmem:[%s291 + $0x14] sm:$0xf]
        %v326 = vld [vmem:[%s291 + $0x18] sm:$0xf]
        %v327 = vld [vmem:[%s291 + $0x1c] sm:$0xf]
        %v328 = vld [vmem:[%s291 + $0x20] sm:$0xf]
        %v329 = vld [vmem:[%s291 + $0x24] sm:$0xf]
        %v330 = vld [vmem:[%s291 + $0x28] sm:$0xf]
        %v331 = vld [vmem:[%s291 + $0x2c] sm:$0xf]
        %v332 = vld [vmem:[%s291 + $0x30] sm:$0xf]
        %v333 = vld [vmem:[%s291 + $0x34] sm:$0xf]
        %v334 = vld [vmem:[%s291 + $0x38] sm:$0xf]
        %v335 = vld [vmem:[%s291 + $0x3c] sm:$0xf]
        %v336 = vld [vmem:[%s291 + $0x40] sm:$0xf]
        %v337 = vld [vmem:[%s291 + $0x44] sm:$0xf]
        %v338 = vld [vmem:[%s291 + $0x48] sm:$0xf]
        %v339 = vld [vmem:[%s291 + $0x4c] sm:$0xf]
        %v340 = vld [vmem:[%s291 + $0x50] sm:$0xf]
        %v341 = vld [vmem:[%s291 + $0x54] sm:$0xf]
        %v342 = vld [vmem:[%s291 + $0x58] sm:$0xf]
        %v343 = vld [vmem:[%s291 + $0x5c] sm:$0xf]
        %v344 = vld [vmem:[%s291 + $0x60] sm:$0xf]
        %v345 = vld [vmem:[%s291 + $0x64] sm:$0xf]
        %v346 = vld [vmem:[%s291 + $0x68] sm:$0xf]
        %v347 = vld [vmem:[%s291 + $0x6c] sm:$0xf]
        %v348 = vld [vmem:[%s291 + $0x70] sm:$0xf]
        %v349 = vld [vmem:[%s291 + $0x74] sm:$0xf]
        %v350 = vld [vmem:[%s291 + $0x78] sm:$0xf]
        %v351 = vld [vmem:[%s291 + $0x7c] sm:$0xf]
        %s352 = sshll.u32 %s319, 16
        %s353 = sor.u32 %s319, %s352
        %v354 = vstv %s353
        %v356 = vmul.bf16 %v354, %v320
        %v357 = vmul.bf16 %v354, %v321
        %v358 = vmul.bf16 %v354, %v322
        %v359 = vmul.bf16 %v354, %v323
        %v360 = vmul.bf16 %v354, %v324
        %v361 = vmul.bf16 %v354, %v325
        %v362 = vmul.bf16 %v354, %v326
        %v363 = vmul.bf16 %v354, %v327
        %v364 = vmul.bf16 %v354, %v328
        %v365 = vmul.bf16 %v354, %v329
        %v366 = vmul.bf16 %v354, %v330
        %v367 = vmul.bf16 %v354, %v331
        %v368 = vmul.bf16 %v354, %v332
        %v369 = vmul.bf16 %v354, %v333
        %v370 = vmul.bf16 %v354, %v334
        %v371 = vmul.bf16 %v354, %v335
        %v372 = vmul.bf16 %v354, %v336
        %v373 = vmul.bf16 %v354, %v337
        %v374 = vmul.bf16 %v354, %v338
        %v375 = vmul.bf16 %v354, %v339
        %v376 = vmul.bf16 %v354, %v340
        %v377 = vmul.bf16 %v354, %v341
        %v378 = vmul.bf16 %v354, %v342
        %v379 = vmul.bf16 %v354, %v343
        %v380 = vmul.bf16 %v354, %v344
        %v381 = vmul.bf16 %v354, %v345
        %v382 = vmul.bf16 %v354, %v346
        %v383 = vmul.bf16 %v354, %v347
        %v384 = vmul.bf16 %v354, %v348
        %v385 = vmul.bf16 %v354, %v349
        %v386 = vmul.bf16 %v354, %v350
        %v387 = vmul.bf16 %v354, %v351
        %p388 = scmp.eq.s32.totalorder %s32, 0
        // Predicated region
        $region37: #{tpu_custom_call.1} parent=35 // pred_check
          %p389 = pneg %p388
        $region38: #{tpu_custom_call.1} parent=35 // pred_check_branch
          %391 = sbr.rel (%p389) target = $region40
        $region39: #{tpu_custom_call.1} parent=35 // pred_region
          %v424 = vunpack.c.l.b16 %v356
          %v425 = vunpack.c.l.b16 %v357
          %v426 = vunpack.c.l.b16 %v358
          %v427 = vunpack.c.l.b16 %v359
          %v428 = vunpack.c.l.b16 %v360
          %v429 = vunpack.c.l.b16 %v361
          %v430 = vunpack.c.l.b16 %v362
          %v431 = vunpack.c.l.b16 %v363
          %v432 = vunpack.c.l.b16 %v364
          %v433 = vunpack.c.l.b16 %v365
          %v434 = vunpack.c.l.b16 %v366
          %v435 = vunpack.c.l.b16 %v367
          %v436 = vunpack.c.l.b16 %v368
          %v437 = vunpack.c.l.b16 %v369
          %v438 = vunpack.c.l.b16 %v370
          %v439 = vunpack.c.l.b16 %v371
          %v440 = vunpack.c.l.b16 %v372
          %v441 = vunpack.c.l.b16 %v373
          %v442 = vunpack.c.l.b16 %v374
          %v443 = vunpack.c.l.b16 %v375
          %v444 = vunpack.c.l.b16 %v376
          %v445 = vunpack.c.l.b16 %v377
          %v446 = vunpack.c.l.b16 %v378
          %v447 = vunpack.c.l.b16 %v379
          %v448 = vunpack.c.l.b16 %v380
          %v449 = vunpack.c.l.b16 %v381
          %v450 = vunpack.c.l.b16 %v382
          %v451 = vunpack.c.l.b16 %v383
          %v452 = vunpack.c.l.b16 %v384
          %v453 = vunpack.c.l.b16 %v385
          %v454 = vunpack.c.l.b16 %v386
          %v455 = vunpack.c.l.b16 %v387
          %v456 = vpack.c.b16 %v425, %v424
          %v457 = vpack.c.b16 %v427, %v426
          %v458 = vpack.c.b16 %v429, %v428
          %v459 = vpack.c.b16 %v431, %v430
          %v460 = vpack.c.b16 %v433, %v432
          %v461 = vpack.c.b16 %v435, %v434
          %v462 = vpack.c.b16 %v437, %v436
          %v463 = vpack.c.b16 %v439, %v438
          %v464 = vpack.c.b16 %v441, %v440
          %v465 = vpack.c.b16 %v443, %v442
          %v466 = vpack.c.b16 %v445, %v444
          %v467 = vpack.c.b16 %v447, %v446
          %v468 = vpack.c.b16 %v449, %v448
          %v469 = vpack.c.b16 %v451, %v450
          %v470 = vpack.c.b16 %v453, %v452
          %v471 = vpack.c.b16 %v455, %v454
          %vm488 = vcmask 261120
          %489 = vst.msk [vmem:[#allocation2] sm:$0xff] %vm488, %v456
          %490 = vst.msk [vmem:[#allocation2 + $0x8] sm:$0xff] %vm488, %v457
          %491 = vst.msk [vmem:[#allocation2 + $0x10] sm:$0xff] %vm488, %v458
          %492 = vst.msk [vmem:[#allocation2 + $0x18] sm:$0xff] %vm488, %v459
          %493 = vst.msk [vmem:[#allocation2 + $0x20] sm:$0xff] %vm488, %v460
          %494 = vst.msk [vmem:[#allocation2 + $0x28] sm:$0xff] %vm488, %v461
          %495 = vst.msk [vmem:[#allocation2 + $0x30] sm:$0xff] %vm488, %v462
          %496 = vst.msk [vmem:[#allocation2 + $0x38] sm:$0xff] %vm488, %v463
          %497 = vst.msk [vmem:[#allocation2 + $0x40] sm:$0xff] %vm488, %v464
          %498 = vst.msk [vmem:[#allocation2 + $0x48] sm:$0xff] %vm488, %v465
          %499 = vst.msk [vmem:[#allocation2 + $0x50] sm:$0xff] %vm488, %v466
          %500 = vst.msk [vmem:[#allocation2 + $0x58] sm:$0xff] %vm488, %v467
          %501 = vst.msk [vmem:[#allocation2 + $0x60] sm:$0xff] %vm488, %v468
          %502 = vst.msk [vmem:[#allocation2 + $0x68] sm:$0xff] %vm488, %v469
          %503 = vst.msk [vmem:[#allocation2 + $0x70] sm:$0xff] %vm488, %v470
          %504 = vst.msk [vmem:[#allocation2 + $0x78] sm:$0xff] %vm488, %v471
        $region40: #{tpu_custom_call.1} parent=35 // pred_fallthru
          _
        %p505 = scmp.gt.s32.totalorder %s32, 0
        // Predicated region
        $region41: #{tpu_custom_call.1} parent=35 // pred_check
          %p506 = pneg %p505
        $region42: #{tpu_custom_call.1} parent=35 // pred_check_branch
          %508 = sbr.rel (%p506) target = $region44
        $region43: #{tpu_custom_call.1} parent=35 // pred_region
          %v509 = vld [vmem:[#allocation2] sm:$0xff]
          %v510 = vld [vmem:[#allocation2 + $0x8] sm:$0xff]
          %v511 = vld [vmem:[#allocation2 + $0x10] sm:$0xff]
          %v512 = vld [vmem:[#allocation2 + $0x18] sm:$0xff]
          %v513 = vld [vmem:[#allocation2 + $0x20] sm:$0xff]
          %v514 = vld [vmem:[#allocation2 + $0x28] sm:$0xff]
          %v515 = vld [vmem:[#allocation2 + $0x30] sm:$0xff]
          %v516 = vld [vmem:[#allocation2 + $0x38] sm:$0xff]
          %v517 = vld [vmem:[#allocation2 + $0x40] sm:$0xff]
          %v518 = vld [vmem:[#allocation2 + $0x48] sm:$0xff]
          %v519 = vld [vmem:[#allocation2 + $0x50] sm:$0xff]
          %v520 = vld [vmem:[#allocation2 + $0x58] sm:$0xff]
          %v521 = vld [vmem:[#allocation2 + $0x60] sm:$0xff]
          %v522 = vld [vmem:[#allocation2 + $0x68] sm:$0xff]
          %v523 = vld [vmem:[#allocation2 + $0x70] sm:$0xff]
          %v524 = vld [vmem:[#allocation2 + $0x78] sm:$0xff]
          %v557 = vunpack.c.l.b16 %v356
          %v558 = vunpack.c.l.b16 %v357
          %v559 = vunpack.c.l.b16 %v358
          %v560 = vunpack.c.l.b16 %v359
          %v561 = vunpack.c.l.b16 %v360
          %v562 = vunpack.c.l.b16 %v361
          %v563 = vunpack.c.l.b16 %v362
          %v564 = vunpack.c.l.b16 %v363
          %v565 = vunpack.c.l.b16 %v364
          %v566 = vunpack.c.l.b16 %v365
          %v567 = vunpack.c.l.b16 %v366
          %v568 = vunpack.c.l.b16 %v367
          %v569 = vunpack.c.l.b16 %v368
          %v570 = vunpack.c.l.b16 %v369
          %v571 = vunpack.c.l.b16 %v370
          %v572 = vunpack.c.l.b16 %v371
          %v573 = vunpack.c.l.b16 %v372
          %v574 = vunpack.c.l.b16 %v373
          %v575 = vunpack.c.l.b16 %v374
          %v576 = vunpack.c.l.b16 %v375
          %v577 = vunpack.c.l.b16 %v376
          %v578 = vunpack.c.l.b16 %v377
          %v579 = vunpack.c.l.b16 %v378
          %v580 = vunpack.c.l.b16 %v379
          %v581 = vunpack.c.l.b16 %v380
          %v582 = vunpack.c.l.b16 %v381
          %v583 = vunpack.c.l.b16 %v382
          %v584 = vunpack.c.l.b16 %v383
          %v585 = vunpack.c.l.b16 %v384
          %v586 = vunpack.c.l.b16 %v385
          %v587 = vunpack.c.l.b16 %v386
          %v588 = vunpack.c.l.b16 %v387
          %v589 = vpack.c.b16 %v558, %v557
          %v590 = vpack.c.b16 %v560, %v559
          %v591 = vpack.c.b16 %v562, %v561
          %v592 = vpack.c.b16 %v564, %v563
          %v593 = vpack.c.b16 %v566, %v565
          %v594 = vpack.c.b16 %v568, %v567
          %v595 = vpack.c.b16 %v570, %v569
          %v596 = vpack.c.b16 %v572, %v571
          %v597 = vpack.c.b16 %v574, %v573
          %v598 = vpack.c.b16 %v576, %v575
          %v599 = vpack.c.b16 %v578, %v577
          %v600 = vpack.c.b16 %v580, %v579
          %v601 = vpack.c.b16 %v582, %v581
          %v602 = vpack.c.b16 %v584, %v583
          %v603 = vpack.c.b16 %v586, %v585
          %v604 = vpack.c.b16 %v588, %v587
          %v621 = vadd.bf16 %v509, %v589
          %v622 = vadd.bf16 %v510, %v590
          %v623 = vadd.bf16 %v511, %v591
          %v624 = vadd.bf16 %v512, %v592
          %v625 = vadd.bf16 %v513, %v593
          %v626 = vadd.bf16 %v514, %v594
          %v627 = vadd.bf16 %v515, %v595
          %v628 = vadd.bf16 %v516, %v596
          %v629 = vadd.bf16 %v517, %v597
          %v630 = vadd.bf16 %v518, %v598
          %v631 = vadd.bf16 %v519, %v599
          %v632 = vadd.bf16 %v520, %v600
          %v633 = vadd.bf16 %v521, %v601
          %v634 = vadd.bf16 %v522, %v602
          %v635 = vadd.bf16 %v523, %v603
          %v636 = vadd.bf16 %v524, %v604
          %vm637 = vcmask 261120
          %638 = vst.msk [vmem:[#allocation2] sm:$0xff] %vm637, %v621
          %639 = vst.msk [vmem:[#allocation2 + $0x8] sm:$0xff] %vm637, %v622
          %640 = vst.msk [vmem:[#allocation2 + $0x10] sm:$0xff] %vm637, %v623
          %641 = vst.msk [vmem:[#allocation2 + $0x18] sm:$0xff] %vm637, %v624
          %642 = vst.msk [vmem:[#allocation2 + $0x20] sm:$0xff] %vm637, %v625
          %643 = vst.msk [vmem:[#allocation2 + $0x28] sm:$0xff] %vm637, %v626
          %644 = vst.msk [vmem:[#allocation2 + $0x30] sm:$0xff] %vm637, %v627
          %645 = vst.msk [vmem:[#allocation2 + $0x38] sm:$0xff] %vm637, %v628
          %646 = vst.msk [vmem:[#allocation2 + $0x40] sm:$0xff] %vm637, %v629
          %647 = vst.msk [vmem:[#allocation2 + $0x48] sm:$0xff] %vm637, %v630
          %648 = vst.msk [vmem:[#allocation2 + $0x50] sm:$0xff] %vm637, %v631
          %649 = vst.msk [vmem:[#allocation2 + $0x58] sm:$0xff] %vm637, %v632
          %650 = vst.msk [vmem:[#allocation2 + $0x60] sm:$0xff] %vm637, %v633
          %651 = vst.msk [vmem:[#allocation2 + $0x68] sm:$0xff] %vm637, %v634
          %652 = vst.msk [vmem:[#allocation2 + $0x70] sm:$0xff] %vm637, %v635
          %653 = vst.msk [vmem:[#allocation2 + $0x78] sm:$0xff] %vm637, %v636
        $region44: #{tpu_custom_call.1} parent=35 // pred_fallthru
          _
        %p654 = scmp.eq.s32.totalorder %s32, 3
        // Predicated region
        $region45: #{tpu_custom_call.1} parent=35 // pred_check
          %p655 = pneg %p654
        $region46: #{tpu_custom_call.1} parent=35 // pred_check_branch
          %657 = sbr.rel (%p655) target = $region48
        $region47: #{tpu_custom_call.1} parent=35 // pred_region
          %v658 = vld [vmem:[%s301] sm:$0xff]
          %v659 = vld [vmem:[%s301 + $0x8] sm:$0xff]
          %v660 = vld [vmem:[#allocation2] sm:$0xff]
          %v661 = vld [vmem:[#allocation2 + $0x8] sm:$0xff]
          %v662 = vld [vmem:[#allocation2 + $0x10] sm:$0xff]
          %v663 = vld [vmem:[#allocation2 + $0x18] sm:$0xff]
          %v664 = vld [vmem:[#allocation2 + $0x20] sm:$0xff]
          %v665 = vld [vmem:[#allocation2 + $0x28] sm:$0xff]
          %v666 = vld [vmem:[#allocation2 + $0x30] sm:$0xff]
          %v667 = vld [vmem:[#allocation2 + $0x38] sm:$0xff]
          %v668 = vld [vmem:[#allocation2 + $0x40] sm:$0xff]
          %v669 = vld [vmem:[#allocation2 + $0x48] sm:$0xff]
          %v670 = vld [vmem:[#allocation2 + $0x50] sm:$0xff]
          %v671 = vld [vmem:[#allocation2 + $0x58] sm:$0xff]
          %v672 = vld [vmem:[#allocation2 + $0x60] sm:$0xff]
          %v673 = vld [vmem:[#allocation2 + $0x68] sm:$0xff]
          %v674 = vld [vmem:[#allocation2 + $0x70] sm:$0xff]
          %v675 = vld [vmem:[#allocation2 + $0x78] sm:$0xff]
          %v678 = vunpack.c.l.b16 %v658
          %v679 = vunpack.c.h.b16 %v658
          %v680 = vunpack.c.l.b16 %v659
          %v681 = vunpack.c.h.b16 %v659
          %v682 = vpack.c.b16 %v680, %v678
          %v683 = vpack.c.b16 %v681, %v679
          %686 = vmatprep.subr.bf16.mxu0 0
          %687 = vmatpush1.bf16.msra.mxu0 %v660
          %688 = vmatprep.subr.bf16.mxu0 0
          %689 = vmatpush1.bf16.msra.mxu0 %v661
          %690 = vmatprep.subr.bf16.mxu0 0
          %691 = vmatpush1.bf16.msra.mxu0 %v662
          %692 = vmatprep.subr.bf16.mxu0 0
          %693 = vmatpush1.bf16.msra.mxu0 %v663
          %694 = vmatprep.subr.bf16.mxu0 0
          %695 = vmatpush1.bf16.msra.mxu0 %v664
          %696 = vmatprep.subr.bf16.mxu0 0
          %697 = vmatpush1.bf16.msra.mxu0 %v665
          %698 = vmatprep.subr.bf16.mxu0 0
          %699 = vmatpush1.bf16.msra.mxu0 %v666
          %700 = vmatprep.subr.bf16.mxu0 0
          %701 = vmatpush1.bf16.msra.mxu0 %v667
          %702 = vmatprep.subr.bf16.mxu0 0
          %703 = vmatpush1.bf16.msra.mxu0 %v668
          %704 = vmatprep.subr.bf16.mxu0 0
          %705 = vmatpush1.bf16.msra.mxu0 %v669
          %706 = vmatprep.subr.bf16.mxu0 0
          %707 = vmatpush1.bf16.msra.mxu0 %v670
          %708 = vmatprep.subr.bf16.mxu0 0
          %709 = vmatpush1.bf16.msra.mxu0 %v671
          %710 = vmatprep.subr.bf16.mxu0 0
          %711 = vmatpush1.bf16.msra.mxu0 %v672
          %712 = vmatprep.subr.bf16.mxu0 0
          %713 = vmatpush1.bf16.msra.mxu0 %v673
          %714 = vmatprep.subr.bf16.mxu0 0
          %715 = vmatpush1.bf16.msra.mxu0 %v674
          %716 = vmatprep.subr.bf16.mxu0 0
          %717 = vmatpush1.bf16.msra.mxu0 %v675
          %718 = vmatprep.mubr.bf16.mxu0 %v683
          %719 = vmatmul.mubr.bf16.gmra.mrb[0].mxu0 %v682
          %v720 = vpop.f32.mrb[0].mxu0
          %v721 = vadd.f32 0.0, %v720
          %v722 = vpop.f32.mrb[0].mxu0
          %v723 = vpop.f32.mrb[0].mxu0
          %v724 = vadd.f32 0.0, %v723
          %v725 = vpop.f32.mrb[0].mxu0
          %726 = vdwg.mxu0
          %v727 = vld [vmem:[%s307] sm:$0xff]
          %v728 = vld [vmem:[%s307 + $0x8] sm:$0xff]
          %730 = vset.pattern.permute.xlu0 0
          %731 = vperm.xlu0 %730, %v727
          %v732 = vpop.permute.xlu0 %731
          %735 = vset.pattern.permute.xlu0 0
          %736 = vperm.xlu0 %735, %v728
          %v737 = vpop.permute.xlu0 %736
          %v739 = vmul.f32 %v721, %v732
          %v740 = vmul.f32 %v724, %v737
          %v741 = vpack.c.bf16 %v740, %v739
          %v742 = vld [vmem:[%s4] sm:$0xf]
          %v743 = vld [vmem:[%s4 + $0x4] sm:$0xf]
          %v744 = vld [vmem:[%s4 + $0x8] sm:$0xf]
          %v745 = vld [vmem:[%s4 + $0xc] sm:$0xf]
          %v750 = vunpack.c.l.b16 %v742
          %v751 = vunpack.c.l.b16 %v743
          %v752 = vunpack.c.l.b16 %v744
          %v753 = vunpack.c.l.b16 %v745
          %v754 = vpack.c.b16 %v751, %v750
          %v755 = vpack.c.b16 %v753, %v752
          %vm758 = vcmask 261120
          %v760 = vsel %vm758, %v741, 0
          %762 = vmatprep.subr.bf16.mxu0 0
          %763 = vmatpush1.bf16.msra.mxu0 %v754
          %764 = vmatprep.subr.bf16.mxu0 0
          %765 = vmatpush1.bf16.msra.mxu0 %v755
          %766 = vmatprep.subr.bf16.mxu0 0
          %767 = vmatpush1.bf16.msra.mxu0 0
          %768 = vmatprep.subr.bf16.mxu0 0
          %769 = vmatpush1.bf16.msra.mxu0 0
          %770 = vmatprep.subr.bf16.mxu0 0
          %771 = vmatpush1.bf16.msra.mxu0 0
          %772 = vmatprep.subr.bf16.mxu0 0
          %773 = vmatpush1.bf16.msra.mxu0 0
          %774 = vmatprep.subr.bf16.mxu0 0
          %775 = vmatpush1.bf16.msra.mxu0 0
          %776 = vmatprep.subr.bf16.mxu0 0
          %777 = vmatpush1.bf16.msra.mxu0 0
          %778 = vmatprep.subr.bf16.mxu0 0
          %779 = vmatpush1.bf16.msra.mxu0 0
          %780 = vmatprep.subr.bf16.mxu0 0
          %781 = vmatpush1.bf16.msra.mxu0 0
          %782 = vmatprep.subr.bf16.mxu0 0
          %783 = vmatpush1.bf16.msra.mxu0 0
          %784 = vmatprep.subr.bf16.mxu0 0
          %785 = vmatpush1.bf16.msra.mxu0 0
          %786 = vmatprep.subr.bf16.mxu0 0
          %787 = vmatpush1.bf16.msra.mxu0 0
          %788 = vmatprep.subr.bf16.mxu0 0
          %789 = vmatpush1.bf16.msra.mxu0 0
          %790 = vmatprep.subr.bf16.mxu0 0
          %791 = vmatpush1.bf16.msra.mxu0 0
          %792 = vmatprep.subr.bf16.mxu0 0
          %793 = vmatpush1.bf16.msra.mxu0 0
          %794 = vmatprep.mubr.bf16.mxu0 0
          %795 = vmatmul.mubr.bf16.gmra.mrb[0].mxu0 %v760
          %v796 = vpop.f32.mrb[0].mxu0
          %v797 = vadd.f32 0.0, %v796
          %v798 = vpop.f32.mrb[0].mxu0
          %v799 = vpop.f32.mrb[0].mxu0
          %v800 = vadd.f32 0.0, %v799
          %v801 = vpop.f32.mrb[0].mxu0
          %802 = vdwg.mxu0
          %803 = vst [vmem:[%s278] sm:$0xff] %v797
          %804 = vst [vmem:[%s278 + $0x8] sm:$0xff] %v800
        $region48: #{tpu_custom_call.1} parent=35 // pred_fallthru
          _
        %s805 = sand.u32 %s157, 1
        %s806 = scalar_lea.sflag [#allocation6], %s805
        %s807 = sand.u32 %s157, 1
        %s808 = smul.addr %s807, 16
        %s809 = scalar_lea.vmem [#allocation5], %s808
        // Predicated region
        $region49: #{tpu_custom_call.1} parent=35 // pred_check
          %p810 = pneg %p167
        $region50: #{tpu_custom_call.1} parent=35 // pred_check_branch
          %812 = sbr.rel (%p810) target = $region52
        $region51: #{tpu_custom_call.1} parent=35 // pred_region
          %s814 = ssub.s32 256, 256
          %815 = vsyncadd %s806, %s814
          %s816 = smul.addr %s30, 2
          %s817 = smul.addr %s816, 128
          %s818 = scalar_lea.hbm %s5, %s817
          %s819 = sshll.u32 %s809, 4
          %s820 = int_to_ptr.vmem [resolvable:$true] %s819
          %825 = dma.vmem_to_hbm [thread:$0]  %s820, 256, %s818, %s806, 128, 128, 8
        $region52: #{tpu_custom_call.1} parent=35 // pred_fallthru
          _
      $region36: #{tpu_custom_call.1} parent=5 // pred_fallthru
        _
      %p826 = scmp.le.s32.totalorder 2, %s20
      // Predicated region
      $region53: #{tpu_custom_call.1} parent=5 // pred_check
        %p827 = pneg %p826
      $region54: #{tpu_custom_call.1} parent=5 // pred_check_branch
        %829 = sbr.rel (%p827) target = $region56
      $region55: #{tpu_custom_call.1} parent=5 // pred_region
        %s830 = ssub.s32 %s20, 2
        // Predicated region
        $region57: #{tpu_custom_call.1} parent=55 // pred_check
          %p831 = pneg %p173
        $region58: #{tpu_custom_call.1} parent=55 // pred_check_branch
          %833 = sbr.rel (%p831) target = $region60
        $region59: #{tpu_custom_call.1} parent=55 // pred_region
          %s834 = sand.u32 %s158, 1
          %s835 = scalar_lea.sflag [#allocation6], %s834
          %s836 = sand.u32 %s158, 1
          %s837 = smul.addr %s836, 16
          %s838 = scalar_lea.vmem [#allocation5], %s837
          %839 = dma.done %s835, 256
        $region60: #{tpu_custom_call.1} parent=55 // pred_fallthru
          _
      $region56: #{tpu_custom_call.1} parent=5 // pred_fallthru
        _
    $region6: #{tpu_custom_call.1} parent=1 // loop_footer
      %s24 = sadd.s32 1, %s20
    $region7: #{tpu_custom_call.1} parent=1 // loop_footer_branch
      %19 = sbr.rel target = $region3
    $region8: #{tpu_custom_call.1} parent=1 // loop_exit
      _
    %840 = vsyncpa [#allocation6], 1
    %s841 = scalar_lea.sflag [#allocation6], 1
    %842 = vsyncpa %s841, 1

</llo_original>
